<compile_context>
chip_gen: v7x
topology: tpu7x:2x2x1
jax: 0.10.0
libtpu: 0.0.40
codegen_flags: <defaults>
</compile_context>

<pallas_src>
import functools

import numpy as np
import jax
import jax.numpy as jnp
from jax.experimental import pallas as pl
from jax.experimental.pallas import tpu as pltpu


def _round_up(n, m):
    return ((n + m - 1) // m) * m


_ALIGN = 16  # bf16 sublane-tile height; all packed-param row offsets align to this.


def _derive(L):
    """Static layer geometry + packed-parameter row layout for input length L."""
    L1 = L - 4            # conv1 output length
    P1 = L1 // 4          # after MaxPool1d(4)   (floor, like torch)
    L2 = P1 - 2           # conv2 output length
    P2 = L2 // 2          # after MaxPool1d(2)
    if P2 < 1:
        raise ValueError("in_dims too small for ConvNN")
    blk1 = _round_up(P1 * 16, 128)      # pooled conv1 features, lane-padded
    blk2 = _round_up(P2 * 32, 128)      # pooled conv2 features, lane-padded
    lanes = max(blk1, blk2, 128)        # packed-parameter lane width (128 for L=36)
    rW1 = _round_up(L, _ALIGN)          # rows reserved per conv1 band slab
    o_w2 = 4 * rW1                      # conv2 slabs (each blk1 rows; blk1 % 16 == 0)
    o_f1 = o_w2 + 2 * blk1              # FC1 slab (blk2 rows)
    o_b = o_f1 + blk2                   # 5 bias / weight-vector rows
    rows = _round_up(o_b + 5, _ALIGN)
    return L1, P1, L2, P2, blk1, blk2, lanes, rW1, o_w2, o_f1, o_b, rows


# --------------------------------------------------------------------------- #
# Kernel
# --------------------------------------------------------------------------- #
def _convnn_kernel(L, blk1, blk2, rW1, o_w2, o_f1, o_b, x_ref, p_ref, out_ref):
    """One batch-tile of the ConvNN forward.

    x_ref   : (TB, L)        input tile (any float dtype), one sample per row
    p_ref   : (rows, lanes)  bf16 packed parameters (see prepare_params)
    out_ref : (TB, 1)        f32
    """
    x = x_ref[...].astype(jnp.bfloat16)                            # (TB, L)

    # Conv1d(1,16,5) + MaxPool1d(4): four N=blk1 banded matmuls (one per pool
    # offset) folded with a running max.  Bias (constant per pool window) is
    # added after the max; ReLU follows.
    def band1(r):
        return jnp.dot(x, p_ref[r * rW1:r * rW1 + L, 0:blk1],
                       preferred_element_type=jnp.float32)         # (TB, blk1)

    m1 = jnp.maximum(jnp.maximum(band1(0), band1(1)),
                     jnp.maximum(band1(2), band1(3)))
    a1 = jnp.maximum(m1 + p_ref[o_b:o_b + 1, 0:blk1], 0.0
                     ).astype(jnp.bfloat16)                        # (TB, blk1)

    # Conv1d(16,32,3) + MaxPool1d(2): two N=blk2 banded matmuls + running max.
    def band2(r):
        return jnp.dot(a1, p_ref[o_w2 + r * blk1:o_w2 + (r + 1) * blk1, 0:blk2],
                       preferred_element_type=jnp.float32)         # (TB, blk2)

    m2 = jnp.maximum(band2(0), band2(1))
    a2 = jnp.maximum(m2 + p_ref[o_b + 1:o_b + 2, 0:blk2], 0.0
                     ).astype(jnp.bfloat16)                        # (TB, blk2)

    # Flatten(start_dim=0) + LazyLinear(32) + ReLU as ONE matmul — torch's
    # channel-major flatten order is pre-baked into the packed FC1 weight rows;
    # weight columns 32..127 are zero padding.
    h = jnp.dot(a2, p_ref[o_f1:o_f1 + blk2, 0:128],
                preferred_element_type=jnp.float32)                # (TB, 128)
    h = jnp.maximum(h + p_ref[o_b + 2:o_b + 3, 0:128], 0.0)

    # Linear(32, 1) on the VPU/XLU (broadcast multiply + 128-lane reduce):
    # avoids an N=1 MXU fill/drain on the serial tail.  wf2 row is zero past
    # lane 31, so the padded h columns contribute nothing.
    w2 = p_ref[o_b + 3:o_b + 4, 0:128].astype(jnp.float32)         # (1, 128)
    out = jnp.sum(h * w2, axis=-1, keepdims=True)                  # (TB, 1)
    out_ref[...] = out + p_ref[o_b + 4:o_b + 5, 0:1].astype(jnp.float32)


# --------------------------------------------------------------------------- #
# Parameter initialisation + one-time repack (off the hot path)
# --------------------------------------------------------------------------- #
def init_params(key, in_dims):
    """Deterministic synthetic parameters matching the torch module's shapes
    (PyTorch default uniform(-1/sqrt(fan_in), 1/sqrt(fan_in)) style)."""
    L = in_dims
    _, P1, _, P2, *_ = _derive(L)
    feat = 32 * P2                      # LazyLinear infers this at first call

    ks = jax.random.split(key, 8)

    def u(k, shape, fan_in):
        bound = 1.0 / np.sqrt(fan_in)
        return jax.random.uniform(k, shape, jnp.float32, -bound, bound)

    w1 = u(ks[0], (16, 1, 5), 1 * 5)    # Conv1d(1, 16, 5)
    b1 = u(ks[1], (16,), 1 * 5)
    w2 = u(ks[2], (32, 16, 3), 16 * 3)  # Conv1d(16, 32, 3)
    b2 = u(ks[3], (32,), 16 * 3)
    wf1 = u(ks[4], (32, feat), feat)    # LazyLinear(32)
    bf1 = u(ks[5], (32,), feat)
    wf2 = u(ks[6], (1, 32), 32)         # Linear(32, 1)
    bf2 = u(ks[7], (1,), 32)
    return (w1, b1, w2, b2, wf1, bf1, wf2, bf2)


def prepare_params(params, in_dims):
    """One-time repack of torch-layout parameters into a single bf16 buffer of
    shape (rows, lanes), lanes = max(blk1, blk2, 128).  Row layout (all slab
    offsets are multiples of 16 so every in-kernel slice is an aligned view):

      rows [r*rW1, r*rW1+L), r=0..3 : conv1 band slab for pool offset r,
                                        col = j*16 + o  (pooled step j, chan o)
      rows [o_w2 + r*blk1, +blk1)    : conv2 band slab for pool offset r,
                                        col = j*32 + c_out
      rows [o_f1, o_f1+blk2)         : FC1 weight, rows permuted from torch's
                                        channel-major flatten order, 32 used cols
      rows o_b .. o_b+4              : b1(pooled), b2(pooled), bf1, wf2 row, bf2
    """
    w1, b1, w2, b2, wf1, bf1, wf2, bf2 = (np.asarray(p, np.float32) for p in params)
    L = in_dims
    L1, P1, L2, P2, blk1, blk2, lanes, rW1, o_w2, o_f1, o_b, rows = _derive(L)

    pk = np.zeros((rows, lanes), np.float32)

    # conv1 band slabs: slab_r[i, j*16 + o] = w1[o, 0, i - (4j + r)]
    for r in range(4):
        for j in range(P1):
            c0 = j * 16
            for k in range(5):
                pk[r * rW1 + 4 * j + r + k, c0:c0 + 16] = w1[:, 0, k]

    # conv2 band slabs over the pooled, time-major conv1 features:
    # slab_r[t'*16 + c_in, j*32 + c_out] = w2[c_out, c_in, t' - (2j + r)]
    for r in range(2):
        for j in range(P2):
            c0 = j * 32
            for k in range(3):
                tp = 2 * j + r + k
                r0 = o_w2 + r * blk1 + tp * 16
                pk[r0:r0 + 16, c0:c0 + 32] = w2[:, :, k].T

    # FC1: torch Flatten(start_dim=0) index is c*P2 + j (channel-major); the
    # kernel's a2 column index is j*32 + c (time-major).  Permute rows once.
    for j in range(P2):
        for c in range(32):
            pk[o_f1 + j * 32 + c, 0:32] = wf1[:, c * P2 + j]

    pk[o_b, 0:P1 * 16] = np.tile(b1, P1)         # pooled-layout conv1 bias
    pk[o_b + 1, 0:P2 * 32] = np.tile(b2, P2)     # pooled-layout conv2 bias
    pk[o_b + 2, 0:32] = bf1
    pk[o_b + 3, 0:32] = wf2[0, :]                # final weight as a lane row
    pk[o_b + 4, 0] = bf2[0]
    return jnp.asarray(pk, dtype=jnp.bfloat16)


# --------------------------------------------------------------------------- #
# Forward wrappers
# --------------------------------------------------------------------------- #
@functools.partial(jax.jit, static_argnames=("in_dims", "batch_tile"))
def _convnn_batched(xb, packed, *, in_dims, batch_tile):
    L = in_dims
    (_, _, _, _, blk1, blk2, lanes, rW1,
     o_w2, o_f1, o_b, rows) = _derive(L)
    assert packed.shape == (rows, lanes), packed.shape
    assert packed.dtype == jnp.bfloat16, packed.dtype

    B = xb.shape[0]
    # Keep the batch dim sublane-aligned (<= 7 pad rows); the *tile* remainder
    # is handled by Pallas' masked partial last block, not by a full-array pad.
    B8 = _round_up(B, 8)
    if B8 != B:
        xb = jnp.pad(xb, ((0, B8 - B), (0, 0)))
    nsteps = pl.cdiv(B8, batch_tile)

    kernel = functools.partial(_convnn_kernel, L, blk1, blk2, rW1, o_w2, o_f1, o_b)

    flops = int(2 * B8 * (4 * L * blk1 + 2 * blk1 * blk2 + blk2 * 128 + 128))
    bytes_accessed = int(B8 * L * xb.dtype.itemsize + B8 * 4 + rows * lanes * 2)

    out = pl.pallas_call(
        kernel,
        out_shape=jax.ShapeDtypeStruct((B8, 1), jnp.float32),
        grid_spec=pltpu.PrefetchScalarGridSpec(
            num_scalar_prefetch=0,
            grid=(nsteps,),
            in_specs=[
                pl.BlockSpec((batch_tile, L), lambda i: (i, 0)),
                # Constant index_map: the single packed-parameter buffer (~150 KB
                # bf16) is DMA'd once and stays VMEM-resident across the grid.
                pl.BlockSpec((rows, lanes), lambda i: (0, 0)),
            ],
            out_specs=pl.BlockSpec((batch_tile, 1), lambda i: (i, 0)),
        ),
        compiler_params=pltpu.CompilerParams(
            dimension_semantics=("parallel",)),   # v7x: tiles split across 2 TCs
        cost_estimate=pl.CostEstimate(
            flops=flops, transcendentals=0, bytes_accessed=bytes_accessed),
    )(xb, packed)
    return out[:B]


def convnn_forward(x, packed, in_dims, batch_tile=1024):
    """ConvNN.forward.

    x: (L,) or (1, L)  -> single sample (the torch module's calling
                          convention), returns shape (1,).
       (B, L), B > 1   -> batch of independent samples (vmap of the module's
                          forward), returns shape (B, 1).
    `packed` comes from prepare_params() (built once, off the hot path).
    x may be passed as bfloat16 to halve the per-sample HBM stream; the kernel
    casts to bf16 for the MXU either way.
    On v7x prefer a batch_tile such that cdiv(B, batch_tile) >= 2 so both
    TensorCores are used.
    """
    single = (x.ndim == 1) or (x.ndim == 2 and x.shape[0] == 1)
    xb = x.reshape(1, -1) if single else x
    B = xb.shape[0]
    tb = _round_up(min(batch_tile, _round_up(B, 8)), 8)
    out = _convnn_batched(xb, packed, in_dims=in_dims, batch_tile=tb)
    return out.reshape(1) if single else out


# --------------------------------------------------------------------------- #
# Plain-JAX reference (replicates the PyTorch forward, NCL layout)
# --------------------------------------------------------------------------- #
def torch_style_reference(x, params):
    w1, b1, w2, b2, wf1, bf1, wf2, bf2 = params
    if x.ndim == 1:
        x = x[None, :]                  # (1, L) = (C=1, L) unbatched
    dn = ('NCH', 'OIH', 'NCH')
    y1 = jax.lax.conv_general_dilated(x[None], w1, (1,), 'VALID',
                                      dimension_numbers=dn)[0] + b1[:, None]
    t1 = (y1.shape[1] // 4) * 4
    a1 = jnp.maximum(y1[:, :t1].reshape(16, -1, 4).max(axis=2), 0.0)
    y2 = jax.lax.conv_general_dilated(a1[None], w2, (1,), 'VALID',
                                      dimension_numbers=dn)[0] + b2[:, None]
    t2 = (y2.shape[1] // 2) * 2
    a2 = jnp.maximum(y2[:, :t2].reshape(32, -1, 2).max(axis=2), 0.0)
    flat = a2.reshape(-1)               # channel-major flatten
    h = jnp.maximum(wf1 @ flat + bf1, 0.0)
    return wf2 @ h + bf2                # (1,)


if __name__ == "__main__":
    IN_DIMS = 36          # 1-D input length (the module's in_dims)
    BATCH = 200           # not a multiple of the tile -> exercises masked last tile

    key = jax.random.PRNGKey(0)
    kx, kp = jax.random.split(key)

    params = init_params(kp, IN_DIMS)
    packed = prepare_params(params, IN_DIMS)   # one-time repack, off the hot path

    x_batch = jax.random.normal(kx, (BATCH, IN_DIMS), jnp.float32)

    # Batched forward through the Pallas kernel (small tile so the grid has
    # two steps: one full 128-row tile + one masked partial tile).
    out = jax.block_until_ready(
        convnn_forward(x_batch, packed, IN_DIMS, batch_tile=128))
    assert out.shape == (BATCH, 1), out.shape

    # Verify against the plain-JAX replica of the torch module (vmapped).
    # Tolerances account for bf16 MXU operands (weights / activations).
    ref = jax.block_until_ready(
        jax.vmap(lambda xi: torch_style_reference(xi, params))(x_batch))
    np.testing.assert_allclose(np.asarray(out), np.asarray(ref),
                               rtol=5e-2, atol=1e-2)

    # Single-sample path (the torch module's native (L,) -> (1,) convention).
    out1 = jax.block_until_ready(convnn_forward(x_batch[0], packed, IN_DIMS))
    assert out1.shape == (1,), out1.shape
    np.testing.assert_allclose(np.asarray(out1), np.asarray(ref[0]),
                               rtol=5e-2, atol=1e-2)

    print("KERNEL_OK")
</pallas_src>

<mosaic_0001>
module attributes {stable_mosaic.version = 11 : i64} {
  func.func @_convnn_kernel(%arg0: i32, %arg1: memref<128x36xf32, #tpu.memory_space<vmem>>, %arg2: memref<592x128xbf16, #tpu.memory_space<vmem>>, %arg3: memref<128x1xf32, #tpu.memory_space<vmem>>) attributes {dimension_semantics = [#tpu.dimension_semantics<parallel>], iteration_bounds = array<i64: 2>, scalar_prefetch = 0 : i64, scratch_operands = 0 : i64, tpu.core_type = #tpu.core_type<tc>, window_params = [{transform_indices = @transform_0, window_bounds = array<i64: 128, 36>}, {pipeline_mode = #tpu.pipeline_mode<synchronous>, transform_indices = @transform_1, window_bounds = array<i64: 592, 128>}, {transform_indices = @transform_2, window_bounds = array<i64: 128, 1>}]} {
    %c0 = arith.constant 0 : index
    %c0_0 = arith.constant 0 : index
    %0 = vector.load %arg1[%c0, %c0_0] : memref<128x36xf32, #tpu.memory_space<vmem>>, vector<128x36xf32>
    %1 = arith.truncf %0 : vector<128x36xf32> to vector<128x36xbf16>
    %c0_1 = arith.constant 0 : index
    %c0_2 = arith.constant 0 : index
    %2 = vector.load %arg2[%c0_1, %c0_2] : memref<592x128xbf16, #tpu.memory_space<vmem>>, vector<36x128xbf16>
    %cst = arith.constant dense<0.000000e+00> : vector<128x128xf32>
    %3 = tpu.matmul %1, %2, %cst {dimension_numbers = #tpu.dot_dimension_numbers<[1], [0], [0], [1], [0, 0, 1, 1], [], []>} : vector<128x36xbf16>, vector<36x128xbf16>, vector<128x128xf32> -> vector<128x128xf32>
    %c48 = arith.constant 48 : index
    %c0_3 = arith.constant 0 : index
    %4 = vector.load %arg2[%c48, %c0_3] : memref<592x128xbf16, #tpu.memory_space<vmem>>, vector<36x128xbf16>
    %cst_4 = arith.constant dense<0.000000e+00> : vector<128x128xf32>
    %5 = tpu.matmul %1, %4, %cst_4 {dimension_numbers = #tpu.dot_dimension_numbers<[1], [0], [0], [1], [0, 0, 1, 1], [], []>} : vector<128x36xbf16>, vector<36x128xbf16>, vector<128x128xf32> -> vector<128x128xf32>
    %6 = arith.maximumf %3, %5 : vector<128x128xf32>
    %c96 = arith.constant 96 : index
    %c0_5 = arith.constant 0 : index
    %7 = vector.load %arg2[%c96, %c0_5] : memref<592x128xbf16, #tpu.memory_space<vmem>>, vector<36x128xbf16>
    %cst_6 = arith.constant dense<0.000000e+00> : vector<128x128xf32>
    %8 = tpu.matmul %1, %7, %cst_6 {dimension_numbers = #tpu.dot_dimension_numbers<[1], [0], [0], [1], [0, 0, 1, 1], [], []>} : vector<128x36xbf16>, vector<36x128xbf16>, vector<128x128xf32> -> vector<128x128xf32>
    %c144 = arith.constant 144 : index
    %c0_7 = arith.constant 0 : index
    %9 = vector.load %arg2[%c144, %c0_7] : memref<592x128xbf16, #tpu.memory_space<vmem>>, vector<36x128xbf16>
    %cst_8 = arith.constant dense<0.000000e+00> : vector<128x128xf32>
    %10 = tpu.matmul %1, %9, %cst_8 {dimension_numbers = #tpu.dot_dimension_numbers<[1], [0], [0], [1], [0, 0, 1, 1], [], []>} : vector<128x36xbf16>, vector<36x128xbf16>, vector<128x128xf32> -> vector<128x128xf32>
    %11 = arith.maximumf %8, %10 : vector<128x128xf32>
    %12 = arith.maximumf %6, %11 : vector<128x128xf32>
    %c576 = arith.constant 576 : index
    %c0_9 = arith.constant 0 : index
    %13 = vector.load %arg2[%c576, %c0_9] : memref<592x128xbf16, #tpu.memory_space<vmem>>, vector<1x128xbf16>
    %14 = arith.extf %13 : vector<1x128xbf16> to vector<1x128xf32>
    %15 = vector.broadcast %14 : vector<1x128xf32> to vector<128x128xf32>
    %16 = arith.addf %12, %15 : vector<128x128xf32>
    %cst_10 = arith.constant 0.000000e+00 : f32
    %17 = vector.broadcast %cst_10 : f32 to vector<128x128xf32>
    %18 = arith.maximumf %16, %17 : vector<128x128xf32>
    %19 = arith.truncf %18 : vector<128x128xf32> to vector<128x128xbf16>
    %c192 = arith.constant 192 : index
    %c0_11 = arith.constant 0 : index
    %20 = vector.load %arg2[%c192, %c0_11] : memref<592x128xbf16, #tpu.memory_space<vmem>>, vector<128x128xbf16>
    %cst_12 = arith.constant dense<0.000000e+00> : vector<128x128xf32>
    %21 = tpu.matmul %19, %20, %cst_12 {dimension_numbers = #tpu.dot_dimension_numbers<[1], [0], [0], [1], [0, 0, 1, 1], [], []>} : vector<128x128xbf16>, vector<128x128xbf16>, vector<128x128xf32> -> vector<128x128xf32>
    %c320 = arith.constant 320 : index
    %c0_13 = arith.constant 0 : index
    %22 = vector.load %arg2[%c320, %c0_13] : memref<592x128xbf16, #tpu.memory_space<vmem>>, vector<128x128xbf16>
    %cst_14 = arith.constant dense<0.000000e+00> : vector<128x128xf32>
    %23 = tpu.matmul %19, %22, %cst_14 {dimension_numbers = #tpu.dot_dimension_numbers<[1], [0], [0], [1], [0, 0, 1, 1], [], []>} : vector<128x128xbf16>, vector<128x128xbf16>, vector<128x128xf32> -> vector<128x128xf32>
    %24 = arith.maximumf %21, %23 : vector<128x128xf32>
    %c577 = arith.constant 577 : index
    %c0_15 = arith.constant 0 : index
    %25 = vector.load %arg2[%c577, %c0_15] : memref<592x128xbf16, #tpu.memory_space<vmem>>, vector<1x128xbf16>
    %26 = arith.extf %25 : vector<1x128xbf16> to vector<1x128xf32>
    %27 = vector.broadcast %26 : vector<1x128xf32> to vector<128x128xf32>
    %28 = arith.addf %24, %27 : vector<128x128xf32>
    %cst_16 = arith.constant 0.000000e+00 : f32
    %29 = vector.broadcast %cst_16 : f32 to vector<128x128xf32>
    %30 = arith.maximumf %28, %29 : vector<128x128xf32>
    %31 = arith.truncf %30 : vector<128x128xf32> to vector<128x128xbf16>
    %c448 = arith.constant 448 : index
    %c0_17 = arith.constant 0 : index
    %32 = vector.load %arg2[%c448, %c0_17] : memref<592x128xbf16, #tpu.memory_space<vmem>>, vector<128x128xbf16>
    %cst_18 = arith.constant dense<0.000000e+00> : vector<128x128xf32>
    %33 = tpu.matmul %31, %32, %cst_18 {dimension_numbers = #tpu.dot_dimension_numbers<[1], [0], [0], [1], [0, 0, 1, 1], [], []>} : vector<128x128xbf16>, vector<128x128xbf16>, vector<128x128xf32> -> vector<128x128xf32>
    %c578 = arith.constant 578 : index
    %c0_19 = arith.constant 0 : index
    %34 = vector.load %arg2[%c578, %c0_19] : memref<592x128xbf16, #tpu.memory_space<vmem>>, vector<1x128xbf16>
    %35 = arith.extf %34 : vector<1x128xbf16> to vector<1x128xf32>
    %36 = vector.broadcast %35 : vector<1x128xf32> to vector<128x128xf32>
    %37 = arith.addf %33, %36 : vector<128x128xf32>
    %cst_20 = arith.constant 0.000000e+00 : f32
    %38 = vector.broadcast %cst_20 : f32 to vector<128x128xf32>
    %39 = arith.maximumf %37, %38 : vector<128x128xf32>
    %c579 = arith.constant 579 : index
    %c0_21 = arith.constant 0 : index
    %40 = vector.load %arg2[%c579, %c0_21] : memref<592x128xbf16, #tpu.memory_space<vmem>>, vector<1x128xbf16>
    %41 = arith.extf %40 : vector<1x128xbf16> to vector<1x128xf32>
    %42 = vector.broadcast %41 : vector<1x128xf32> to vector<128x128xf32>
    %43 = arith.mulf %39, %42 : vector<128x128xf32>
    %cst_22 = arith.constant dense<0.000000e+00> : vector<128xf32>
    %44 = vector.multi_reduction <add>, %43, %cst_22 [1] : vector<128x128xf32> to vector<128xf32>
    %45 = vector.shape_cast %44 : vector<128xf32> to vector<128x1xf32>
    %c580 = arith.constant 580 : index
    %c0_23 = arith.constant 0 : index
    %46 = vector.load %arg2[%c580, %c0_23] : memref<592x128xbf16, #tpu.memory_space<vmem>>, vector<1x1xbf16>
    %47 = arith.extf %46 : vector<1x1xbf16> to vector<1x1xf32>
    %48 = vector.broadcast %47 : vector<1x1xf32> to vector<128x1xf32>
    %49 = arith.addf %45, %48 : vector<128x1xf32>
    %c0_24 = arith.constant 0 : index
    %c0_25 = arith.constant 0 : index
    %50 = vector.load %arg3[%c0_24, %c0_25] : memref<128x1xf32, #tpu.memory_space<vmem>>, vector<128x1xf32>
    tpu.vector_store %arg3[%c0_24, %c0_25], %49 {strides = array<i32>} : memref<128x1xf32, #tpu.memory_space<vmem>>, vector<128x1xf32>,
    return
  }
  func.func @transform_0(%arg0: i32) -> (i32, i32) {
    %c0_i32 = arith.constant 0 : i32
    %c0_i32_0 = arith.constant 0 : i32
    return %arg0, %c0_i32 : i32, i32
  }
  func.func @transform_1(%arg0: i32) -> (i32, i32) {
    %c0_i32 = arith.constant 0 : i32
    %c0_i32_0 = arith.constant 0 : i32
    %c0_i32_1 = arith.constant 0 : i32
    return %c0_i32, %c0_i32_0 : i32, i32
  }
  func.func @transform_2(%arg0: i32) -> (i32, i32) {
    %c0_i32 = arith.constant 0 : i32
    %c0_i32_0 = arith.constant 0 : i32
    return %arg0, %c0_i32 : i32, i32
  }
}

</mosaic_0001>

<llo_original>
// kernel: _convnn_batched.1
$region0: #{_convnn_batched.1}
  #allocation0 [shape = 'u32[]', space=smem, size = 0x4, offset = 0x4, fixed_abs, tag = 'smem constant byte address 0x4 - core index']
  #allocation1 [shape = 'u32[144,128]{1,0:T(1,128)}', space=vmem, size = 0x12000, scoped, tag = 'internal scratch']
  %s0 = inlined_call_operand.vmem [shape: f32[200,36], index: 0, kind: input, shape index: {}]
  %s1 = inlined_call_operand.hbm [shape: bf16[592,128], index: 1, kind: input, shape index: {}]
  %s2 = inlined_call_operand.vmem [shape: f32[200,1], index: 2, kind: output, shape index: {}]
  %s3 = sld [smem:[#allocation0]]
  $region93: #{_convnn_batched.1} parent=0
    _
  %s5 = ssub.s32 1, %s3
  %s6 = scalar_select 0, %s5, %s3
  $region1: #{_convnn_batched.1} parent=0
    #allocation2 [shape = 'u8[151552]{0}', space=vmem, size = 0x25000, scoped, tag = 'input window, operand 1, single buffered']
    #allocation3 [shape = 's32[2]{0}', space=sflag, size = 0x8, scoped, tag = 'scoped memory for _convnn_batched.1']
    #allocation4 [shape = 'u8[131072]{0}', space=vmem, size = 0x20000, scoped, tag = 'output window, operand 0']
    %7 = vsyncpa [#allocation3], 0
    loop: start=0, step=1, limit=4
    $region2: #{_convnn_batched.1} parent=1 // loop_pre_header
      _
    $region3: #{_convnn_batched.1} parent=1 // loop_header
      %s9 = sphi 0, %s13
      %p10 = scmp.ge.s32.totalorder %s9, 4
      %s19 = sphi 0, %s21
      %s22 = sphi 0, %s19
      %s23 = sphi 0, %s22
      %s39 = sphi 0, %s23
      %s43 = sphi 0, %s43
      %s45 = sphi 0, %s43
      %s46 = sphi 0, %s45
      %s60 = sphi 0, %s46
      %s66 = sphi 0, %s68
      %s69 = sphi 0, %s66
      %s70 = sphi 0, %s69
      %s86 = sphi 0, %s70
    $region4: #{_convnn_batched.1} parent=1 // loop_header_branch
      %12 = sbr.rel (%p10) target = $region8
    $region5: #{_convnn_batched.1} parent=1 // loop_body
      %s14 = ssub.s32 %s9, 1
      %s15 = ssub.s32 %s9, 2
      %s16 = sadd.s32 %s9, 1
      %s17 = ssub.s32 %s9, %s16
      %p18 = scmp.eq.s32.totalorder %s17, 0
      %s20 = sadd.s32 %s19, 1
      %s21 = scalar_select %p18, %s19, %s20
      %p24 = pneg %p18
      %p25 = scmp.eq.s32.totalorder %s9, 1
      %p26 = por %p24, %p25
      %p27 = scmp.ne.s32.totalorder %s19, %s22
      %p28 = scmp.eq.s32.totalorder %s9, 0
      %p29 = por %p27, %p28
      %p30 = scmp.ne.s32.totalorder %s19, %s22
      %p31 = scmp.eq.s32.totalorder %s14, 1
      %p32 = por %p30, %p31
      %p33 = scmp.ne.s32.totalorder %s22, %s23
      %p34 = scmp.eq.s32.totalorder %s14, 0
      %p35 = por %p33, %p34
      %p36 = scmp.ne.s32.totalorder %s22, %s23
      %p37 = scmp.eq.s32.totalorder %s15, 1
      %p38 = por %p36, %p37
      %p40 = scmp.ne.s32.totalorder %s23, %s39
      %p41 = scmp.eq.s32.totalorder %s15, 0
      %p42 = por %p40, %p41
      %s44 = sadd.s32 %s43, 1
      %p47 = scmp.eq.s32.totalorder %s9, 1
      %p48 = scmp.ne.s32.totalorder %s43, %s45
      %p49 = scmp.eq.s32.totalorder %s9, 0
      %p50 = por %p48, %p49
      %p51 = scmp.ne.s32.totalorder %s43, %s45
      %p52 = scmp.eq.s32.totalorder %s14, 1
      %p53 = por %p51, %p52
      %p54 = scmp.ne.s32.totalorder %s45, %s46
      %p55 = scmp.eq.s32.totalorder %s14, 0
      %p56 = por %p54, %p55
      %p57 = scmp.ne.s32.totalorder %s45, %s46
      %p58 = scmp.eq.s32.totalorder %s15, 1
      %p59 = por %p57, %p58
      %p61 = scmp.ne.s32.totalorder %s46, %s60
      %p62 = scmp.eq.s32.totalorder %s15, 0
      %p63 = por %p61, %p62
      %s64 = ssub.s32 %s9, %s16
      %p65 = scmp.eq.s32.totalorder %s64, 0
      %s67 = sadd.s32 %s66, 1
      %s68 = scalar_select %p65, %s66, %s67
      %p71 = pneg %p65
      %p72 = scmp.eq.s32.totalorder %s9, 1
      %p73 = por %p71, %p72
      %p74 = scmp.ne.s32.totalorder %s66, %s69
      %p75 = scmp.eq.s32.totalorder %s9, 0
      %p76 = por %p74, %p75
      %p77 = scmp.ne.s32.totalorder %s66, %s69
      %p78 = scmp.eq.s32.totalorder %s14, 1
      %p79 = por %p77, %p78
      %p80 = scmp.ne.s32.totalorder %s69, %s70
      %p81 = scmp.eq.s32.totalorder %s14, 0
      %p82 = por %p80, %p81
      %p83 = scmp.ne.s32.totalorder %s69, %s70
      %p84 = scmp.eq.s32.totalorder %s15, 1
      %p85 = por %p83, %p84
      %p87 = scmp.ne.s32.totalorder %s70, %s86
      %p88 = scmp.eq.s32.totalorder %s15, 0
      %p89 = por %p87, %p88
      %p90 = scmp.le.s32.totalorder 1, %s9
      %p91 = scmp.lt.s32.totalorder %s9, 3
      %p92 = pnand %p90, %p91
      %p93 = pneg %p92
      // Predicated region
      $region9: #{_convnn_batched.1} parent=5 // pred_check
        _
      $region10: #{_convnn_batched.1} parent=5 // pred_check_branch
        %95 = sbr.rel (%p92) target = $region12
      $region11: #{_convnn_batched.1} parent=5 // pred_region
        %s96 = ssub.s32 %s9, 1
        // Predicated region
        $region13: #{_convnn_batched.1} parent=11 // pred_check
          %p97 = pneg %p56
        $region14: #{_convnn_batched.1} parent=11 // pred_check_branch
          %99 = sbr.rel (%p97) target = $region16
        $region15: #{_convnn_batched.1} parent=11 // pred_region
          %s101 = ssub.s32 4736, 4736
          %102 = vsyncadd [#allocation3], %s101
          %s103 = sshll.u32 [#allocation2], 4
          %s104 = int_to_ptr.vmem [resolvable:$true] %s103
          %109 = dma.hbm_to_vmem [thread:$0]  %s1, 4736, %s104, [#allocation3], 64, 64, 4
        $region16: #{_convnn_batched.1} parent=11 // pred_fallthru
          _
      $region12: #{_convnn_batched.1} parent=5 // pred_fallthru
        _
      %p110 = scmp.lt.s32.totalorder %s9, 2
      // Predicated region
      $region17: #{_convnn_batched.1} parent=5 // pred_check
        %p111 = pneg %p110
      $region18: #{_convnn_batched.1} parent=5 // pred_check_branch
        %113 = sbr.rel (%p111) target = $region20
      $region19: #{_convnn_batched.1} parent=5 // pred_region
        // Predicated region
        $region21: #{_convnn_batched.1} parent=19 // pred_check
          %p114 = pneg %p29
        $region22: #{_convnn_batched.1} parent=19 // pred_check_branch
          %116 = sbr.rel (%p114) target = $region24
        $region23: #{_convnn_batched.1} parent=19 // pred_region
          %s117 = smul.u32 16, %s9
          %s118 = ssub.s32 25, %s117
          %p119 = scmp.lt.s32.totalorder %s118, 16
          %s120 = scalar_select %p119, %s118, 16
          %s121 = smul.u32 128, %s120
          %p122 = scmp.lt.s32.totalorder %s117, 24
          %s123 = scalar_select %p122, %s117, 24
          %s124 = smul.addr %s123, 8
          %s125 = scalar_lea.vmem %s0, %s124
          %s126 = smul.u32 16, %s9
          %s127 = ssub.s32 25, %s126
          %p128 = scmp.lt.s32.totalorder %s127, 16
          %s129 = scalar_select %p128, %s127, 16
          %s130 = smul.u32 128, %s129
        $region24: #{_convnn_batched.1} parent=19 // pred_fallthru
          _
      $region20: #{_convnn_batched.1} parent=5 // pred_fallthru
        _
      %p131 = scmp.le.s32.totalorder 1, %s9
      %p132 = scmp.lt.s32.totalorder %s9, 3
      %p133 = pnand %p131, %p132
      %p134 = pneg %p133
      // Predicated region
      $region25: #{_convnn_batched.1} parent=5 // pred_check
        _
      $region26: #{_convnn_batched.1} parent=5 // pred_check_branch
        %136 = sbr.rel (%p133) target = $region28
      $region27: #{_convnn_batched.1} parent=5 // pred_region
        %s137 = ssub.s32 %s9, 1
        // Predicated region
        $region29: #{_convnn_batched.1} parent=27 // pred_check
          %p138 = pneg %p56
        $region30: #{_convnn_batched.1} parent=27 // pred_check_branch
          %140 = sbr.rel (%p138) target = $region32
        $region31: #{_convnn_batched.1} parent=27 // pred_region
          %141 = dma.done [#allocation3], 4736
        $region32: #{_convnn_batched.1} parent=27 // pred_fallthru
          _
        %s142 = smul.u32 16, %s14
        %s143 = ssub.s32 25, %s142
        %p144 = scmp.lt.s32.totalorder %s143, 16
        %s145 = scalar_select %p144, %s143, 16
        %s146 = smul.u32 128, %s145
        %p147 = scmp.lt.s32.totalorder %s142, 24
        %s148 = scalar_select %p147, %s142, 24
        %s149 = smul.addr %s148, 8
        %s150 = scalar_lea.vmem %s0, %s149
        %p151 = pneg %p35
        %p152 = pneg %p32
        %p153 = pneg %p56
        %p154 = pneg %p53
        %p155 = pneg %p82
        %p156 = pneg %p79
        %s157 = sand.u32 %s69, 1
        %s158 = sand.u32 %s69, 1
        %s159 = smul.addr %s158, 128
        %s160 = scalar_lea.vmem [#allocation4], %s159
        %s161 = smul.u32 16, %s14
        %s162 = ssub.s32 25, %s161
        %p163 = scmp.lt.s32.totalorder %s162, 16
        %s164 = scalar_select %p163, %s162, 16
        %s165 = smul.u32 128, %s164
        %p166 = scmp.lt.s32.totalorder %s161, 24
        %s167 = scalar_select %p166, %s161, 24
        %s168 = smul.addr %s167, 8
        %s169 = scalar_lea.vmem %s0, %s168
        %s170 = smul.u32 16, %s14
        %s171 = ssub.s32 25, %s170
        %p172 = scmp.lt.s32.totalorder %s171, 16
        %s173 = scalar_select %p172, %s171, 16
        %s174 = smul.u32 128, %s173
        %s175 = smul.u32 16, %s14
        %s176 = ssub.s32 25, %s175
        %p177 = scmp.lt.s32.totalorder %s176, 16
        %s178 = scalar_select %p177, %s176, 16
        %s179 = smul.u32 128, %s178
        %v181 = vld [vmem:[%s169] sm:$0xff]
        %v182 = vld [vmem:[%s169 + $0x8] sm:$0xff]
        %v183 = vld [vmem:[%s169 + $0x10] sm:$0xff]
        %v184 = vld [vmem:[%s169 + $0x18] sm:$0xff]
        %v185 = vld [vmem:[%s169 + $0x20] sm:$0xff]
        %v186 = vld [vmem:[%s169 + $0x28] sm:$0xff]
        %v187 = vld [vmem:[%s169 + $0x30] sm:$0xff]
        %v188 = vld [vmem:[%s169 + $0x38] sm:$0xff]
        %v189 = vld [vmem:[%s169 + $0x40] sm:$0xff]
        %v190 = vld [vmem:[%s169 + $0x48] sm:$0xff]
        %v191 = vld [vmem:[%s169 + $0x50] sm:$0xff]
        %v192 = vld [vmem:[%s169 + $0x58] sm:$0xff]
        %v193 = vld [vmem:[%s169 + $0x60] sm:$0xff]
        %v194 = vld [vmem:[%s169 + $0x68] sm:$0xff]
        %v195 = vld [vmem:[%s169 + $0x70] sm:$0xff]
        %v196 = vld [vmem:[%s169 + $0x78] sm:$0xff]
        %v197 = vpack.c.bf16 %v182, %v181
        %v198 = vpack.c.bf16 %v184, %v183
        %v199 = vpack.c.bf16 %v186, %v185
        %v200 = vpack.c.bf16 %v188, %v187
        %v201 = vpack.c.bf16 %v190, %v189
        %v202 = vpack.c.bf16 %v192, %v191
        %v203 = vpack.c.bf16 %v194, %v193
        %v204 = vpack.c.bf16 %v196, %v195
        %v205 = vld [vmem:[#allocation2] sm:$0xf]
        %v206 = vld [vmem:[#allocation2 + $0x4] sm:$0xf]
        %v207 = vld [vmem:[#allocation2 + $0x8] sm:$0xf]
        %v208 = vld [vmem:[#allocation2 + $0xc] sm:$0xf]
        %v209 = vld [vmem:[#allocation2 + $0x10] sm:$0x3]
        %v215 = vunpack.c.l.b16 %v205
        %v216 = vunpack.c.l.b16 %v206
        %v217 = vunpack.c.l.b16 %v207
        %v218 = vunpack.c.l.b16 %v208
        %v219 = vunpack.c.l.b16 %v209
        %v220 = vpack.c.b16 %v216, %v215
        %v221 = vpack.c.b16 %v218, %v217
        %v222 = vpack.c.b16 %v219, %v219
        %vm225 = vcmask 293888
        %v227 = vsel %vm225, %v197, 0
        %v230 = vsel %vm225, %v198, 0
        %v233 = vsel %vm225, %v199, 0
        %v236 = vsel %vm225, %v200, 0
        %v239 = vsel %vm225, %v201, 0
        %v242 = vsel %vm225, %v202, 0
        %v245 = vsel %vm225, %v203, 0
        %v248 = vsel %vm225, %v204, 0
        %vm250 = vcmask 1041408
        %v252 = vsel %vm250, %v222, 0
        %254 = vmatprep.subr.bf16.mxu0 0
        %255 = vmatpush1.bf16.msra.mxu0 %v220
        %256 = vmatprep.subr.bf16.mxu0 0
        %257 = vmatpush1.bf16.msra.mxu0 %v221
        %258 = vmatprep.subr.bf16.mxu0 0
        %259 = vmatpush1.bf16.msra.mxu0 %v252
        %260 = vmatprep.subr.bf16.mxu0 0
        %261 = vmatpush1.bf16.msra.mxu0 0
        %262 = vmatprep.subr.bf16.mxu0 0
        %263 = vmatpush1.bf16.msra.mxu0 0
        %264 = vmatprep.subr.bf16.mxu0 0
        %265 = vmatpush1.bf16.msra.mxu0 0
        %266 = vmatprep.subr.bf16.mxu0 0
        %267 = vmatpush1.bf16.msra.mxu0 0
        %268 = vmatprep.subr.bf16.mxu0 0
        %269 = vmatpush1.bf16.msra.mxu0 0
        %270 = vmatprep.subr.bf16.mxu0 0
        %271 = vmatpush1.bf16.msra.mxu0 0
        %272 = vmatprep.subr.bf16.mxu0 0
        %273 = vmatpush1.bf16.msra.mxu0 0
        %274 = vmatprep.subr.bf16.mxu0 0
        %275 = vmatpush1.bf16.msra.mxu0 0
        %276 = vmatprep.subr.bf16.mxu0 0
        %277 = vmatpush1.bf16.msra.mxu0 0
        %278 = vmatprep.subr.bf16.mxu0 0
        %279 = vmatpush1.bf16.msra.mxu0 0
        %280 = vmatprep.subr.bf16.mxu0 0
        %281 = vmatpush1.bf16.msra.mxu0 0
        %282 = vmatprep.subr.bf16.mxu0 0
        %283 = vmatpush1.bf16.msra.mxu0 0
        %284 = vmatprep.subr.bf16.mxu0 0
        %285 = vmatpush1.bf16.msra.mxu0 0
        %286 = vmatprep.mubr.bf16.mxu0 0
        %287 = vmatmul.mubr.bf16.gmra.mrb[0].mxu0 %v227
        %v288 = vpop.f32.mrb[0].mxu0
        %v289 = vadd.f32 0.0, %v288
        %v290 = vpop.f32.mrb[0].mxu0
        %v291 = vpop.f32.mrb[0].mxu0
        %v292 = vadd.f32 0.0, %v291
        %v293 = vpop.f32.mrb[0].mxu0
        %294 = vmatprep.mubr.bf16.mxu0 0
        %295 = vmatmul.mubr.bf16.gmra.mrb[0].mxu0 %v230
        %v296 = vpop.f32.mrb[0].mxu0
        %v297 = vadd.f32 0.0, %v296
        %v298 = vpop.f32.mrb[0].mxu0
        %v299 = vpop.f32.mrb[0].mxu0
        %v300 = vadd.f32 0.0, %v299
        %v301 = vpop.f32.mrb[0].mxu0
        %302 = vmatprep.mubr.bf16.mxu0 0
        %303 = vmatmul.mubr.bf16.gmra.mrb[0].mxu0 %v233
        %v304 = vpop.f32.mrb[0].mxu0
        %v305 = vadd.f32 0.0, %v304
        %v306 = vpop.f32.mrb[0].mxu0
        %v307 = vpop.f32.mrb[0].mxu0
        %v308 = vadd.f32 0.0, %v307
        %v309 = vpop.f32.mrb[0].mxu0
        %310 = vmatprep.mubr.bf16.mxu0 0
        %311 = vmatmul.mubr.bf16.gmra.mrb[0].mxu0 %v236
        %v312 = vpop.f32.mrb[0].mxu0
        %v313 = vadd.f32 0.0, %v312
        %v314 = vpop.f32.mrb[0].mxu0
        %v315 = vpop.f32.mrb[0].mxu0
        %v316 = vadd.f32 0.0, %v315
        %v317 = vpop.f32.mrb[0].mxu0
        %318 = vmatprep.mubr.bf16.mxu0 0
        %319 = vmatmul.mubr.bf16.gmra.mrb[0].mxu0 %v239
        %v320 = vpop.f32.mrb[0].mxu0
        %v321 = vadd.f32 0.0, %v320
        %v322 = vpop.f32.mrb[0].mxu0
        %v323 = vpop.f32.mrb[0].mxu0
        %v324 = vadd.f32 0.0, %v323
        %v325 = vpop.f32.mrb[0].mxu0
        %326 = vmatprep.mubr.bf16.mxu0 0
        %327 = vmatmul.mubr.bf16.gmra.mrb[0].mxu0 %v242
        %v328 = vpop.f32.mrb[0].mxu0
        %v329 = vadd.f32 0.0, %v328
        %v330 = vpop.f32.mrb[0].mxu0
        %v331 = vpop.f32.mrb[0].mxu0
        %v332 = vadd.f32 0.0, %v331
        %v333 = vpop.f32.mrb[0].mxu0
        %334 = vmatprep.mubr.bf16.mxu0 0
        %335 = vmatmul.mubr.bf16.gmra.mrb[0].mxu0 %v245
        %v336 = vpop.f32.mrb[0].mxu0
        %v337 = vadd.f32 0.0, %v336
        %v338 = vpop.f32.mrb[0].mxu0
        %v339 = vpop.f32.mrb[0].mxu0
        %v340 = vadd.f32 0.0, %v339
        %v341 = vpop.f32.mrb[0].mxu0
        %342 = vmatprep.mubr.bf16.mxu0 0
        %343 = vmatmul.mubr.bf16.gmra.mrb[0].mxu0 %v248
        %v344 = vpop.f32.mrb[0].mxu0
        %v345 = vadd.f32 0.0, %v344
        %v346 = vpop.f32.mrb[0].mxu0
        %v347 = vpop.f32.mrb[0].mxu0
        %v348 = vadd.f32 0.0, %v347
        %v349 = vpop.f32.mrb[0].mxu0
        %350 = vdwg.mxu0
        %v351 = vld [vmem:[#allocation2 + $0x18] sm:$0xf]
        %v352 = vld [vmem:[#allocation2 + $0x1c] sm:$0xf]
        %v353 = vld [vmem:[#allocation2 + $0x20] sm:$0xf]
        %v354 = vld [vmem:[#allocation2 + $0x24] sm:$0xf]
        %v355 = vld [vmem:[#allocation2 + $0x28] sm:$0x3]
        %v361 = vunpack.c.l.b16 %v351
        %v362 = vunpack.c.l.b16 %v352
        %v363 = vunpack.c.l.b16 %v353
        %v364 = vunpack.c.l.b16 %v354
        %v365 = vunpack.c.l.b16 %v355
        %v366 = vpack.c.b16 %v362, %v361
        %v367 = vpack.c.b16 %v364, %v363
        %v368 = vpack.c.b16 %v365, %v365
        %v372 = vsel %vm250, %v368, 0
        %374 = vmatprep.subr.bf16.mxu0 0
        %375 = vmatpush1.bf16.msra.mxu0 %v366
        %376 = vmatprep.subr.bf16.mxu0 0
        %377 = vmatpush1.bf16.msra.mxu0 %v367
        %378 = vmatprep.subr.bf16.mxu0 0
        %379 = vmatpush1.bf16.msra.mxu0 %v372
        %380 = vmatprep.subr.bf16.mxu0 0
        %381 = vmatpush1.bf16.msra.mxu0 0
        %382 = vmatprep.subr.bf16.mxu0 0
        %383 = vmatpush1.bf16.msra.mxu0 0
        %384 = vmatprep.subr.bf16.mxu0 0
        %385 = vmatpush1.bf16.msra.mxu0 0
        %386 = vmatprep.subr.bf16.mxu0 0
        %387 = vmatpush1.bf16.msra.mxu0 0
        %388 = vmatprep.subr.bf16.mxu0 0
        %389 = vmatpush1.bf16.msra.mxu0 0
        %390 = vmatprep.subr.bf16.mxu0 0
        %391 = vmatpush1.bf16.msra.mxu0 0
        %392 = vmatprep.subr.bf16.mxu0 0
        %393 = vmatpush1.bf16.msra.mxu0 0
        %394 = vmatprep.subr.bf16.mxu0 0
        %395 = vmatpush1.bf16.msra.mxu0 0
        %396 = vmatprep.subr.bf16.mxu0 0
        %397 = vmatpush1.bf16.msra.mxu0 0
        %398 = vmatprep.subr.bf16.mxu0 0
        %399 = vmatpush1.bf16.msra.mxu0 0
        %400 = vmatprep.subr.bf16.mxu0 0
        %401 = vmatpush1.bf16.msra.mxu0 0
        %402 = vmatprep.subr.bf16.mxu0 0
        %403 = vmatpush1.bf16.msra.mxu0 0
        %404 = vmatprep.subr.bf16.mxu0 0
        %405 = vmatpush1.bf16.msra.mxu0 0
        %406 = vmatprep.mubr.bf16.mxu0 0
        %407 = vmatmul.mubr.bf16.gmra.mrb[0].mxu0 %v227
        %v408 = vpop.f32.mrb[0].mxu0
        %v409 = vadd.f32 0.0, %v408
        %v410 = vpop.f32.mrb[0].mxu0
        %v411 = vpop.f32.mrb[0].mxu0
        %v412 = vadd.f32 0.0, %v411
        %v413 = vpop.f32.mrb[0].mxu0
        %414 = vmatprep.mubr.bf16.mxu0 0
        %415 = vmatmul.mubr.bf16.gmra.mrb[0].mxu0 %v230
        %v416 = vpop.f32.mrb[0].mxu0
        %v417 = vadd.f32 0.0, %v416
        %v418 = vpop.f32.mrb[0].mxu0
        %v419 = vpop.f32.mrb[0].mxu0
        %v420 = vadd.f32 0.0, %v419
        %v421 = vpop.f32.mrb[0].mxu0
        %422 = vmatprep.mubr.bf16.mxu0 0
        %423 = vmatmul.mubr.bf16.gmra.mrb[0].mxu0 %v233
        %v424 = vpop.f32.mrb[0].mxu0
        %v425 = vadd.f32 0.0, %v424
        %v426 = vpop.f32.mrb[0].mxu0
        %v427 = vpop.f32.mrb[0].mxu0
        %v428 = vadd.f32 0.0, %v427
        %v429 = vpop.f32.mrb[0].mxu0
        %430 = vmatprep.mubr.bf16.mxu0 0
        %431 = vmatmul.mubr.bf16.gmra.mrb[0].mxu0 %v236
        %v432 = vpop.f32.mrb[0].mxu0
        %v433 = vadd.f32 0.0, %v432
        %v434 = vpop.f32.mrb[0].mxu0
        %v435 = vpop.f32.mrb[0].mxu0
        %v436 = vadd.f32 0.0, %v435
        %v437 = vpop.f32.mrb[0].mxu0
        %438 = vmatprep.mubr.bf16.mxu0 0
        %439 = vmatmul.mubr.bf16.gmra.mrb[0].mxu0 %v239
        %v440 = vpop.f32.mrb[0].mxu0
        %v441 = vadd.f32 0.0, %v440
        %v442 = vpop.f32.mrb[0].mxu0
        %v443 = vpop.f32.mrb[0].mxu0
        %v444 = vadd.f32 0.0, %v443
        %v445 = vpop.f32.mrb[0].mxu0
        %446 = vmatprep.mubr.bf16.mxu0 0
        %447 = vmatmul.mubr.bf16.gmra.mrb[0].mxu0 %v242
        %v448 = vpop.f32.mrb[0].mxu0
        %v449 = vadd.f32 0.0, %v448
        %v450 = vpop.f32.mrb[0].mxu0
        %v451 = vpop.f32.mrb[0].mxu0
        %v452 = vadd.f32 0.0, %v451
        %v453 = vpop.f32.mrb[0].mxu0
        %454 = vmatprep.mubr.bf16.mxu0 0
        %455 = vmatmul.mubr.bf16.gmra.mrb[0].mxu0 %v245
        %v456 = vpop.f32.mrb[0].mxu0
        %v457 = vadd.f32 0.0, %v456
        %v458 = vpop.f32.mrb[0].mxu0
        %v459 = vpop.f32.mrb[0].mxu0
        %v460 = vadd.f32 0.0, %v459
        %v461 = vpop.f32.mrb[0].mxu0
        %462 = vmatprep.mubr.bf16.mxu0 0
        %463 = vmatmul.mubr.bf16.gmra.mrb[0].mxu0 %v248
        %v464 = vpop.f32.mrb[0].mxu0
        %v465 = vadd.f32 0.0, %v464
        %v466 = vpop.f32.mrb[0].mxu0
        %v467 = vpop.f32.mrb[0].mxu0
        %v468 = vadd.f32 0.0, %v467
        %v469 = vpop.f32.mrb[0].mxu0
        %470 = vdwg.mxu0
        %v471 = vmax.f32 %v289, %v409
        %v472 = vmax.f32 %v292, %v412
        %v473 = vmax.f32 %v297, %v417
        %v474 = vmax.f32 %v300, %v420
        %v475 = vmax.f32 %v305, %v425
        %v476 = vmax.f32 %v308, %v428
        %v477 = vmax.f32 %v313, %v433
        %v478 = vmax.f32 %v316, %v436
        %v479 = vmax.f32 %v321, %v441
        %v480 = vmax.f32 %v324, %v444
        %v481 = vmax.f32 %v329, %v449
        %v482 = vmax.f32 %v332, %v452
        %v483 = vmax.f32 %v337, %v457
        %v484 = vmax.f32 %v340, %v460
        %v485 = vmax.f32 %v345, %v465
        %v486 = vmax.f32 %v348, %v468
        %v487 = vld [vmem:[#allocation2 + $0x30] sm:$0xf]
        %v488 = vld [vmem:[#allocation2 + $0x34] sm:$0xf]
        %v489 = vld [vmem:[#allocation2 + $0x38] sm:$0xf]
        %v490 = vld [vmem:[#allocation2 + $0x3c] sm:$0xf]
        %v491 = vld [vmem:[#allocation2 + $0x40] sm:$0x3]
        %v497 = vunpack.c.l.b16 %v487
        %v498 = vunpack.c.l.b16 %v488
        %v499 = vunpack.c.l.b16 %v489
        %v500 = vunpack.c.l.b16 %v490
        %v501 = vunpack.c.l.b16 %v491
        %v502 = vpack.c.b16 %v498, %v497
        %v503 = vpack.c.b16 %v500, %v499
        %v504 = vpack.c.b16 %v501, %v501
        %v508 = vsel %vm250, %v504, 0
        %510 = vmatprep.subr.bf16.mxu0 0
        %511 = vmatpush1.bf16.msra.mxu0 %v502
        %512 = vmatprep.subr.bf16.mxu0 0
        %513 = vmatpush1.bf16.msra.mxu0 %v503
        %514 = vmatprep.subr.bf16.mxu0 0
        %515 = vmatpush1.bf16.msra.mxu0 %v508
        %516 = vmatprep.subr.bf16.mxu0 0
        %517 = vmatpush1.bf16.msra.mxu0 0
        %518 = vmatprep.subr.bf16.mxu0 0
        %519 = vmatpush1.bf16.msra.mxu0 0
        %520 = vmatprep.subr.bf16.mxu0 0
        %521 = vmatpush1.bf16.msra.mxu0 0
        %522 = vmatprep.subr.bf16.mxu0 0
        %523 = vmatpush1.bf16.msra.mxu0 0
        %524 = vmatprep.subr.bf16.mxu0 0
        %525 = vmatpush1.bf16.msra.mxu0 0
        %526 = vmatprep.subr.bf16.mxu0 0
        %527 = vmatpush1.bf16.msra.mxu0 0
        %528 = vmatprep.subr.bf16.mxu0 0
        %529 = vmatpush1.bf16.msra.mxu0 0
        %530 = vmatprep.subr.bf16.mxu0 0
        %531 = vmatpush1.bf16.msra.mxu0 0
        %532 = vmatprep.subr.bf16.mxu0 0
        %533 = vmatpush1.bf16.msra.mxu0 0
        %534 = vmatprep.subr.bf16.mxu0 0
        %535 = vmatpush1.bf16.msra.mxu0 0
        %536 = vmatprep.subr.bf16.mxu0 0
        %537 = vmatpush1.bf16.msra.mxu0 0
        %538 = vmatprep.subr.bf16.mxu0 0
        %539 = vmatpush1.bf16.msra.mxu0 0
        %540 = vmatprep.subr.bf16.mxu0 0
        %541 = vmatpush1.bf16.msra.mxu0 0
        %542 = vmatprep.mubr.bf16.mxu0 0
        %543 = vmatmul.mubr.bf16.gmra.mrb[0].mxu0 %v227
        %v544 = vpop.f32.mrb[0].mxu0
        %v545 = vadd.f32 0.0, %v544
        %v546 = vpop.f32.mrb[0].mxu0
        %v547 = vpop.f32.mrb[0].mxu0
        %v548 = vadd.f32 0.0, %v547
        %v549 = vpop.f32.mrb[0].mxu0
        %550 = vmatprep.mubr.bf16.mxu0 0
        %551 = vmatmul.mubr.bf16.gmra.mrb[0].mxu0 %v230
        %v552 = vpop.f32.mrb[0].mxu0
        %v553 = vadd.f32 0.0, %v552
        %v554 = vpop.f32.mrb[0].mxu0
        %v555 = vpop.f32.mrb[0].mxu0
        %v556 = vadd.f32 0.0, %v555
        %v557 = vpop.f32.mrb[0].mxu0
        %558 = vmatprep.mubr.bf16.mxu0 0
        %559 = vmatmul.mubr.bf16.gmra.mrb[0].mxu0 %v233
        %v560 = vpop.f32.mrb[0].mxu0
        %v561 = vadd.f32 0.0, %v560
        %v562 = vpop.f32.mrb[0].mxu0
        %v563 = vpop.f32.mrb[0].mxu0
        %v564 = vadd.f32 0.0, %v563
        %v565 = vpop.f32.mrb[0].mxu0
        %566 = vmatprep.mubr.bf16.mxu0 0
        %567 = vmatmul.mubr.bf16.gmra.mrb[0].mxu0 %v236
        %v568 = vpop.f32.mrb[0].mxu0
        %v569 = vadd.f32 0.0, %v568
        %v570 = vpop.f32.mrb[0].mxu0
        %v571 = vpop.f32.mrb[0].mxu0
        %v572 = vadd.f32 0.0, %v571
        %v573 = vpop.f32.mrb[0].mxu0
        %574 = vmatprep.mubr.bf16.mxu0 0
        %575 = vmatmul.mubr.bf16.gmra.mrb[0].mxu0 %v239
        %v576 = vpop.f32.mrb[0].mxu0
        %v577 = vadd.f32 0.0, %v576
        %v578 = vpop.f32.mrb[0].mxu0
        %v579 = vpop.f32.mrb[0].mxu0
        %v580 = vadd.f32 0.0, %v579
        %v581 = vpop.f32.mrb[0].mxu0
        %582 = vmatprep.mubr.bf16.mxu0 0
        %583 = vmatmul.mubr.bf16.gmra.mrb[0].mxu0 %v242
        %v584 = vpop.f32.mrb[0].mxu0
        %v585 = vadd.f32 0.0, %v584
        %v586 = vpop.f32.mrb[0].mxu0
        %v587 = vpop.f32.mrb[0].mxu0
        %v588 = vadd.f32 0.0, %v587
        %v589 = vpop.f32.mrb[0].mxu0
        %590 = vmatprep.mubr.bf16.mxu0 0
        %591 = vmatmul.mubr.bf16.gmra.mrb[0].mxu0 %v245
        %v592 = vpop.f32.mrb[0].mxu0
        %v593 = vadd.f32 0.0, %v592
        %v594 = vpop.f32.mrb[0].mxu0
        %v595 = vpop.f32.mrb[0].mxu0
        %v596 = vadd.f32 0.0, %v595
        %v597 = vpop.f32.mrb[0].mxu0
        %598 = vmatprep.mubr.bf16.mxu0 0
        %599 = vmatmul.mubr.bf16.gmra.mrb[0].mxu0 %v248
        %v600 = vpop.f32.mrb[0].mxu0
        %v601 = vadd.f32 0.0, %v600
        %v602 = vpop.f32.mrb[0].mxu0
        %v603 = vpop.f32.mrb[0].mxu0
        %v604 = vadd.f32 0.0, %v603
        %v605 = vpop.f32.mrb[0].mxu0
        %606 = vdwg.mxu0
        %v607 = vld [vmem:[#allocation2 + $0x48] sm:$0xf]
        %v608 = vld [vmem:[#allocation2 + $0x4c] sm:$0xf]
        %v609 = vld [vmem:[#allocation2 + $0x50] sm:$0xf]
        %v610 = vld [vmem:[#allocation2 + $0x54] sm:$0xf]
        %v611 = vld [vmem:[#allocation2 + $0x58] sm:$0x3]
        %v617 = vunpack.c.l.b16 %v607
        %v618 = vunpack.c.l.b16 %v608
        %v619 = vunpack.c.l.b16 %v609
        %v620 = vunpack.c.l.b16 %v610
        %v621 = vunpack.c.l.b16 %v611
        %v622 = vpack.c.b16 %v618, %v617
        %v623 = vpack.c.b16 %v620, %v619
        %v624 = vpack.c.b16 %v621, %v621
        %v628 = vsel %vm250, %v624, 0
        %630 = vmatprep.subr.bf16.mxu0 0
        %631 = vmatpush1.bf16.msra.mxu0 %v622
        %632 = vmatprep.subr.bf16.mxu0 0
        %633 = vmatpush1.bf16.msra.mxu0 %v623
        %634 = vmatprep.subr.bf16.mxu0 0
        %635 = vmatpush1.bf16.msra.mxu0 %v628
        %636 = vmatprep.subr.bf16.mxu0 0
        %637 = vmatpush1.bf16.msra.mxu0 0
        %638 = vmatprep.subr.bf16.mxu0 0
        %639 = vmatpush1.bf16.msra.mxu0 0
        %640 = vmatprep.subr.bf16.mxu0 0
        %641 = vmatpush1.bf16.msra.mxu0 0
        %642 = vmatprep.subr.bf16.mxu0 0
        %643 = vmatpush1.bf16.msra.mxu0 0
        %644 = vmatprep.subr.bf16.mxu0 0
        %645 = vmatpush1.bf16.msra.mxu0 0
        %646 = vmatprep.subr.bf16.mxu0 0
        %647 = vmatpush1.bf16.msra.mxu0 0
        %648 = vmatprep.subr.bf16.mxu0 0
        %649 = vmatpush1.bf16.msra.mxu0 0
        %650 = vmatprep.subr.bf16.mxu0 0
        %651 = vmatpush1.bf16.msra.mxu0 0
        %652 = vmatprep.subr.bf16.mxu0 0
        %653 = vmatpush1.bf16.msra.mxu0 0
        %654 = vmatprep.subr.bf16.mxu0 0
        %655 = vmatpush1.bf16.msra.mxu0 0
        %656 = vmatprep.subr.bf16.mxu0 0
        %657 = vmatpush1.bf16.msra.mxu0 0
        %658 = vmatprep.subr.bf16.mxu0 0
        %659 = vmatpush1.bf16.msra.mxu0 0
        %660 = vmatprep.subr.bf16.mxu0 0
        %661 = vmatpush1.bf16.msra.mxu0 0
        %662 = vmatprep.mubr.bf16.mxu0 0
        %663 = vmatmul.mubr.bf16.gmra.mrb[0].mxu0 %v227
        %v664 = vpop.f32.mrb[0].mxu0
        %v665 = vadd.f32 0.0, %v664
        %v666 = vpop.f32.mrb[0].mxu0
        %v667 = vpop.f32.mrb[0].mxu0
        %v668 = vadd.f32 0.0, %v667
        %v669 = vpop.f32.mrb[0].mxu0
        %670 = vmatprep.mubr.bf16.mxu0 0
        %671 = vmatmul.mubr.bf16.gmra.mrb[0].mxu0 %v230
        %v672 = vpop.f32.mrb[0].mxu0
        %v673 = vadd.f32 0.0, %v672
        %v674 = vpop.f32.mrb[0].mxu0
        %v675 = vpop.f32.mrb[0].mxu0
        %v676 = vadd.f32 0.0, %v675
        %v677 = vpop.f32.mrb[0].mxu0
        %678 = vmatprep.mubr.bf16.mxu0 0
        %679 = vmatmul.mubr.bf16.gmra.mrb[0].mxu0 %v233
        %v680 = vpop.f32.mrb[0].mxu0
        %v681 = vadd.f32 0.0, %v680
        %v682 = vpop.f32.mrb[0].mxu0
        %v683 = vpop.f32.mrb[0].mxu0
        %v684 = vadd.f32 0.0, %v683
        %v685 = vpop.f32.mrb[0].mxu0
        %686 = vmatprep.mubr.bf16.mxu0 0
        %687 = vmatmul.mubr.bf16.gmra.mrb[0].mxu0 %v236
        %v688 = vpop.f32.mrb[0].mxu0
        %v689 = vadd.f32 0.0, %v688
        %v690 = vpop.f32.mrb[0].mxu0
        %v691 = vpop.f32.mrb[0].mxu0
        %v692 = vadd.f32 0.0, %v691
        %v693 = vpop.f32.mrb[0].mxu0
        %694 = vmatprep.mubr.bf16.mxu0 0
        %695 = vmatmul.mubr.bf16.gmra.mrb[0].mxu0 %v239
        %v696 = vpop.f32.mrb[0].mxu0
        %v697 = vadd.f32 0.0, %v696
        %v698 = vpop.f32.mrb[0].mxu0
        %v699 = vpop.f32.mrb[0].mxu0
        %v700 = vadd.f32 0.0, %v699
        %v701 = vpop.f32.mrb[0].mxu0
        %702 = vmatprep.mubr.bf16.mxu0 0
        %703 = vmatmul.mubr.bf16.gmra.mrb[0].mxu0 %v242
        %v704 = vpop.f32.mrb[0].mxu0
        %v705 = vadd.f32 0.0, %v704
        %v706 = vpop.f32.mrb[0].mxu0
        %v707 = vpop.f32.mrb[0].mxu0
        %v708 = vadd.f32 0.0, %v707
        %v709 = vpop.f32.mrb[0].mxu0
        %710 = vmatprep.mubr.bf16.mxu0 0
        %711 = vmatmul.mubr.bf16.gmra.mrb[0].mxu0 %v245
        %v712 = vpop.f32.mrb[0].mxu0
        %v713 = vadd.f32 0.0, %v712
        %v714 = vpop.f32.mrb[0].mxu0
        %v715 = vpop.f32.mrb[0].mxu0
        %v716 = vadd.f32 0.0, %v715
        %v717 = vpop.f32.mrb[0].mxu0
        %718 = vmatprep.mubr.bf16.mxu0 0
        %719 = vmatmul.mubr.bf16.gmra.mrb[0].mxu0 %v248
        %v720 = vpop.f32.mrb[0].mxu0
        %v721 = vadd.f32 0.0, %v720
        %v722 = vpop.f32.mrb[0].mxu0
        %v723 = vpop.f32.mrb[0].mxu0
        %v724 = vadd.f32 0.0, %v723
        %v725 = vpop.f32.mrb[0].mxu0
        %726 = vdwg.mxu0
        %v727 = vmax.f32 %v545, %v665
        %v728 = vmax.f32 %v548, %v668
        %v729 = vmax.f32 %v553, %v673
        %v730 = vmax.f32 %v556, %v676
        %v731 = vmax.f32 %v561, %v681
        %v732 = vmax.f32 %v564, %v684
        %v733 = vmax.f32 %v569, %v689
        %v734 = vmax.f32 %v572, %v692
        %v735 = vmax.f32 %v577, %v697
        %v736 = vmax.f32 %v580, %v700
        %v737 = vmax.f32 %v585, %v705
        %v738 = vmax.f32 %v588, %v708
        %v739 = vmax.f32 %v593, %v713
        %v740 = vmax.f32 %v596, %v716
        %v741 = vmax.f32 %v601, %v721
        %v742 = vmax.f32 %v604, %v724
        %v743 = vmax.f32 %v471, %v727
        %v744 = vmax.f32 %v472, %v728
        %v745 = vmax.f32 %v473, %v729
        %v746 = vmax.f32 %v474, %v730
        %v747 = vmax.f32 %v475, %v731
        %v748 = vmax.f32 %v476, %v732
        %v749 = vmax.f32 %v477, %v733
        %v750 = vmax.f32 %v478, %v734
        %v751 = vmax.f32 %v479, %v735
        %v752 = vmax.f32 %v480, %v736
        %v753 = vmax.f32 %v481, %v737
        %v754 = vmax.f32 %v482, %v738
        %v755 = vmax.f32 %v483, %v739
        %v756 = vmax.f32 %v484, %v740
        %v757 = vmax.f32 %v485, %v741
        %v758 = vmax.f32 %v486, %v742
        %v759 = vld [vmem:[#allocation2 + $0x120] sm:$0x1]
        %v760 = vunpack.c.l.bf16 %v759
        %v761 = vlaneseq
        %v762 = vshrl.u32 %v761, 7
        %v763 = vsub.s32 0, %v762
        %v764 = vrot.slane %v760, %v763
        %v765 = vadd.f32 %v743, %v764
        %v766 = vadd.f32 %v744, %v764
        %v767 = vadd.f32 %v745, %v764
        %v768 = vadd.f32 %v746, %v764
        %v769 = vadd.f32 %v747, %v764
        %v770 = vadd.f32 %v748, %v764
        %v771 = vadd.f32 %v749, %v764
        %v772 = vadd.f32 %v750, %v764
        %v773 = vadd.f32 %v751, %v764
        %v774 = vadd.f32 %v752, %v764
        %v775 = vadd.f32 %v753, %v764
        %v776 = vadd.f32 %v754, %v764
        %v777 = vadd.f32 %v755, %v764
        %v778 = vadd.f32 %v756, %v764
        %v779 = vadd.f32 %v757, %v764
        %v780 = vadd.f32 %v758, %v764
        %v781 = vmax.f32 %v765, 0.0
        %v782 = vmax.f32 %v766, 0.0
        %v783 = vmax.f32 %v767, 0.0
        %v784 = vmax.f32 %v768, 0.0
        %v785 = vmax.f32 %v769, 0.0
        %v786 = vmax.f32 %v770, 0.0
        %v787 = vmax.f32 %v771, 0.0
        %v788 = vmax.f32 %v772, 0.0
        %v789 = vmax.f32 %v773, 0.0
        %v790 = vmax.f32 %v774, 0.0
        %v791 = vmax.f32 %v775, 0.0
        %v792 = vmax.f32 %v776, 0.0
        %v793 = vmax.f32 %v777, 0.0
        %v794 = vmax.f32 %v778, 0.0
        %v795 = vmax.f32 %v779, 0.0
        %v796 = vmax.f32 %v780, 0.0
        %v797 = vpack.c.bf16 %v782, %v781
        %v798 = vpack.c.bf16 %v784, %v783
        %v799 = vpack.c.bf16 %v786, %v785
        %v800 = vpack.c.bf16 %v788, %v787
        %v801 = vpack.c.bf16 %v790, %v789
        %v802 = vpack.c.bf16 %v792, %v791
        %v803 = vpack.c.bf16 %v794, %v793
        %v804 = vpack.c.bf16 %v796, %v795
        %v805 = vld [vmem:[#allocation2 + $0x60] sm:$0xf]
        %v806 = vld [vmem:[#allocation2 + $0x64] sm:$0xf]
        %v807 = vld [vmem:[#allocation2 + $0x68] sm:$0xf]
        %v808 = vld [vmem:[#allocation2 + $0x6c] sm:$0xf]
        %v809 = vld [vmem:[#allocation2 + $0x70] sm:$0xf]
        %v810 = vld [vmem:[#allocation2 + $0x74] sm:$0xf]
        %v811 = vld [vmem:[#allocation2 + $0x78] sm:$0xf]
        %v812 = vld [vmem:[#allocation2 + $0x7c] sm:$0xf]
        %v813 = vld [vmem:[#allocation2 + $0x80] sm:$0xf]
        %v814 = vld [vmem:[#allocation2 + $0x84] sm:$0xf]
        %v815 = vld [vmem:[#allocation2 + $0x88] sm:$0xf]
        %v816 = vld [vmem:[#allocation2 + $0x8c] sm:$0xf]
        %v817 = vld [vmem:[#allocation2 + $0x90] sm:$0xf]
        %v818 = vld [vmem:[#allocation2 + $0x94] sm:$0xf]
        %v819 = vld [vmem:[#allocation2 + $0x98] sm:$0xf]
        %v820 = vld [vmem:[#allocation2 + $0x9c] sm:$0xf]
        %v837 = vunpack.c.l.b16 %v805
        %v838 = vunpack.c.l.b16 %v806
        %v839 = vunpack.c.l.b16 %v807
        %v840 = vunpack.c.l.b16 %v808
        %v841 = vunpack.c.l.b16 %v809
        %v842 = vunpack.c.l.b16 %v810
        %v843 = vunpack.c.l.b16 %v811
        %v844 = vunpack.c.l.b16 %v812
        %v845 = vunpack.c.l.b16 %v813
        %v846 = vunpack.c.l.b16 %v814
        %v847 = vunpack.c.l.b16 %v815
        %v848 = vunpack.c.l.b16 %v816
        %v849 = vunpack.c.l.b16 %v817
        %v850 = vunpack.c.l.b16 %v818
        %v851 = vunpack.c.l.b16 %v819
        %v852 = vunpack.c.l.b16 %v820
        %v853 = vpack.c.b16 %v838, %v837
        %v854 = vpack.c.b16 %v840, %v839
        %v855 = vpack.c.b16 %v842, %v841
        %v856 = vpack.c.b16 %v844, %v843
        %v857 = vpack.c.b16 %v846, %v845
        %v858 = vpack.c.b16 %v848, %v847
        %v859 = vpack.c.b16 %v850, %v849
        %v860 = vpack.c.b16 %v852, %v851
        %869 = vmatprep.subr.bf16.mxu0 0
        %870 = vmatpush1.bf16.msra.mxu0 %v853
        %871 = vmatprep.subr.bf16.mxu0 0
        %872 = vmatpush1.bf16.msra.mxu0 %v854
        %873 = vmatprep.subr.bf16.mxu0 0
        %874 = vmatpush1.bf16.msra.mxu0 %v855
        %875 = vmatprep.subr.bf16.mxu0 0
        %876 = vmatpush1.bf16.msra.mxu0 %v856
        %877 = vmatprep.subr.bf16.mxu0 0
        %878 = vmatpush1.bf16.msra.mxu0 %v857
        %879 = vmatprep.subr.bf16.mxu0 0
        %880 = vmatpush1.bf16.msra.mxu0 %v858
        %881 = vmatprep.subr.bf16.mxu0 0
        %882 = vmatpush1.bf16.msra.mxu0 %v859
        %883 = vmatprep.subr.bf16.mxu0 0
        %884 = vmatpush1.bf16.msra.mxu0 %v860
        %885 = vmatprep.subr.bf16.mxu0 0
        %886 = vmatpush1.bf16.msra.mxu0 0
        %887 = vmatprep.subr.bf16.mxu0 0
        %888 = vmatpush1.bf16.msra.mxu0 0
        %889 = vmatprep.subr.bf16.mxu0 0
        %890 = vmatpush1.bf16.msra.mxu0 0
        %891 = vmatprep.subr.bf16.mxu0 0
        %892 = vmatpush1.bf16.msra.mxu0 0
        %893 = vmatprep.subr.bf16.mxu0 0
        %894 = vmatpush1.bf16.msra.mxu0 0
        %895 = vmatprep.subr.bf16.mxu0 0
        %896 = vmatpush1.bf16.msra.mxu0 0
        %897 = vmatprep.subr.bf16.mxu0 0
        %898 = vmatpush1.bf16.msra.mxu0 0
        %899 = vmatprep.subr.bf16.mxu0 0
        %900 = vmatpush1.bf16.msra.mxu0 0
        %901 = vmatprep.mubr.bf16.mxu0 0
        %902 = vmatmul.mubr.bf16.gmra.mrb[0].mxu0 %v797
        %v903 = vpop.f32.mrb[0].mxu0
        %v904 = vadd.f32 0.0, %v903
        %v905 = vpop.f32.mrb[0].mxu0
        %v906 = vpop.f32.mrb[0].mxu0
        %v907 = vadd.f32 0.0, %v906
        %v908 = vpop.f32.mrb[0].mxu0
        %909 = vmatprep.mubr.bf16.mxu0 0
        %910 = vmatmul.mubr.bf16.gmra.mrb[0].mxu0 %v798
        %v911 = vpop.f32.mrb[0].mxu0
        %v912 = vadd.f32 0.0, %v911
        %v913 = vpop.f32.mrb[0].mxu0
        %v914 = vpop.f32.mrb[0].mxu0
        %v915 = vadd.f32 0.0, %v914
        %v916 = vpop.f32.mrb[0].mxu0
        %917 = vmatprep.mubr.bf16.mxu0 0
        %918 = vmatmul.mubr.bf16.gmra.mrb[0].mxu0 %v799
        %v919 = vpop.f32.mrb[0].mxu0
        %v920 = vadd.f32 0.0, %v919
        %v921 = vpop.f32.mrb[0].mxu0
        %v922 = vpop.f32.mrb[0].mxu0
        %v923 = vadd.f32 0.0, %v922
        %v924 = vpop.f32.mrb[0].mxu0
        %925 = vmatprep.mubr.bf16.mxu0 0
        %926 = vmatmul.mubr.bf16.gmra.mrb[0].mxu0 %v800
        %v927 = vpop.f32.mrb[0].mxu0
        %v928 = vadd.f32 0.0, %v927
        %v929 = vpop.f32.mrb[0].mxu0
        %v930 = vpop.f32.mrb[0].mxu0
        %v931 = vadd.f32 0.0, %v930
        %v932 = vpop.f32.mrb[0].mxu0
        %933 = vmatprep.mubr.bf16.mxu0 0
        %934 = vmatmul.mubr.bf16.gmra.mrb[0].mxu0 %v801
        %v935 = vpop.f32.mrb[0].mxu0
        %v936 = vadd.f32 0.0, %v935
        %v937 = vpop.f32.mrb[0].mxu0
        %v938 = vpop.f32.mrb[0].mxu0
        %v939 = vadd.f32 0.0, %v938
        %v940 = vpop.f32.mrb[0].mxu0
        %941 = vmatprep.mubr.bf16.mxu0 0
        %942 = vmatmul.mubr.bf16.gmra.mrb[0].mxu0 %v802
        %v943 = vpop.f32.mrb[0].mxu0
        %v944 = vadd.f32 0.0, %v943
        %v945 = vpop.f32.mrb[0].mxu0
        %v946 = vpop.f32.mrb[0].mxu0
        %v947 = vadd.f32 0.0, %v946
        %v948 = vpop.f32.mrb[0].mxu0
        %949 = vmatprep.mubr.bf16.mxu0 0
        %950 = vmatmul.mubr.bf16.gmra.mrb[0].mxu0 %v803
        %v951 = vpop.f32.mrb[0].mxu0
        %v952 = vadd.f32 0.0, %v951
        %v953 = vpop.f32.mrb[0].mxu0
        %v954 = vpop.f32.mrb[0].mxu0
        %v955 = vadd.f32 0.0, %v954
        %v956 = vpop.f32.mrb[0].mxu0
        %957 = vmatprep.mubr.bf16.mxu0 0
        %958 = vmatmul.mubr.bf16.gmra.mrb[0].mxu0 %v804
        %v959 = vpop.f32.mrb[0].mxu0
        %v960 = vadd.f32 0.0, %v959
        %v961 = vpop.f32.mrb[0].mxu0
        %v962 = vpop.f32.mrb[0].mxu0
        %v963 = vadd.f32 0.0, %v962
        %v964 = vpop.f32.mrb[0].mxu0
        %965 = vdwg.mxu0
        %v966 = vld [vmem:[#allocation2 + $0xa0] sm:$0xf]
        %v967 = vld [vmem:[#allocation2 + $0xa4] sm:$0xf]
        %v968 = vld [vmem:[#allocation2 + $0xa8] sm:$0xf]
        %v969 = vld [vmem:[#allocation2 + $0xac] sm:$0xf]
        %v970 = vld [vmem:[#allocation2 + $0xb0] sm:$0xf]
        %v971 = vld [vmem:[#allocation2 + $0xb4] sm:$0xf]
        %v972 = vld [vmem:[#allocation2 + $0xb8] sm:$0xf]
        %v973 = vld [vmem:[#allocation2 + $0xbc] sm:$0xf]
        %v974 = vld [vmem:[#allocation2 + $0xc0] sm:$0xf]
        %v975 = vld [vmem:[#allocation2 + $0xc4] sm:$0xf]
        %v976 = vld [vmem:[#allocation2 + $0xc8] sm:$0xf]
        %v977 = vld [vmem:[#allocation2 + $0xcc] sm:$0xf]
        %v978 = vld [vmem:[#allocation2 + $0xd0] sm:$0xf]
        %v979 = vld [vmem:[#allocation2 + $0xd4] sm:$0xf]
        %v980 = vld [vmem:[#allocation2 + $0xd8] sm:$0xf]
        %v981 = vld [vmem:[#allocation2 + $0xdc] sm:$0xf]
        %v998 = vunpack.c.l.b16 %v966
        %v999 = vunpack.c.l.b16 %v967
        %v1000 = vunpack.c.l.b16 %v968
        %v1001 = vunpack.c.l.b16 %v969
        %v1002 = vunpack.c.l.b16 %v970
        %v1003 = vunpack.c.l.b16 %v971
        %v1004 = vunpack.c.l.b16 %v972
        %v1005 = vunpack.c.l.b16 %v973
        %v1006 = vunpack.c.l.b16 %v974
        %v1007 = vunpack.c.l.b16 %v975
        %v1008 = vunpack.c.l.b16 %v976
        %v1009 = vunpack.c.l.b16 %v977
        %v1010 = vunpack.c.l.b16 %v978
        %v1011 = vunpack.c.l.b16 %v979
        %v1012 = vunpack.c.l.b16 %v980
        %v1013 = vunpack.c.l.b16 %v981
        %v1014 = vpack.c.b16 %v999, %v998
        %v1015 = vpack.c.b16 %v1001, %v1000
        %v1016 = vpack.c.b16 %v1003, %v1002
        %v1017 = vpack.c.b16 %v1005, %v1004
        %v1018 = vpack.c.b16 %v1007, %v1006
        %v1019 = vpack.c.b16 %v1009, %v1008
        %v1020 = vpack.c.b16 %v1011, %v1010
        %v1021 = vpack.c.b16 %v1013, %v1012
        %1030 = vmatprep.subr.bf16.mxu0 0
        %1031 = vmatpush1.bf16.msra.mxu0 %v1014
        %1032 = vmatprep.subr.bf16.mxu0 0
        %1033 = vmatpush1.bf16.msra.mxu0 %v1015
        %1034 = vmatprep.subr.bf16.mxu0 0
        %1035 = vmatpush1.bf16.msra.mxu0 %v1016
        %1036 = vmatprep.subr.bf16.mxu0 0
        %1037 = vmatpush1.bf16.msra.mxu0 %v1017
        %1038 = vmatprep.subr.bf16.mxu0 0
        %1039 = vmatpush1.bf16.msra.mxu0 %v1018
        %1040 = vmatprep.subr.bf16.mxu0 0
        %1041 = vmatpush1.bf16.msra.mxu0 %v1019
        %1042 = vmatprep.subr.bf16.mxu0 0
        %1043 = vmatpush1.bf16.msra.mxu0 %v1020
        %1044 = vmatprep.subr.bf16.mxu0 0
        %1045 = vmatpush1.bf16.msra.mxu0 %v1021
        %1046 = vmatprep.subr.bf16.mxu0 0
        %1047 = vmatpush1.bf16.msra.mxu0 0
        %1048 = vmatprep.subr.bf16.mxu0 0
        %1049 = vmatpush1.bf16.msra.mxu0 0
        %1050 = vmatprep.subr.bf16.mxu0 0
        %1051 = vmatpush1.bf16.msra.mxu0 0
        %1052 = vmatprep.subr.bf16.mxu0 0
        %1053 = vmatpush1.bf16.msra.mxu0 0
        %1054 = vmatprep.subr.bf16.mxu0 0
        %1055 = vmatpush1.bf16.msra.mxu0 0
        %1056 = vmatprep.subr.bf16.mxu0 0
        %1057 = vmatpush1.bf16.msra.mxu0 0
        %1058 = vmatprep.subr.bf16.mxu0 0
        %1059 = vmatpush1.bf16.msra.mxu0 0
        %1060 = vmatprep.subr.bf16.mxu0 0
        %1061 = vmatpush1.bf16.msra.mxu0 0
        %1062 = vmatprep.mubr.bf16.mxu0 0
        %1063 = vmatmul.mubr.bf16.gmra.mrb[0].mxu0 %v797
        %v1064 = vpop.f32.mrb[0].mxu0
        %v1065 = vadd.f32 0.0, %v1064
        %v1066 = vpop.f32.mrb[0].mxu0
        %v1067 = vpop.f32.mrb[0].mxu0
        %v1068 = vadd.f32 0.0, %v1067
        %v1069 = vpop.f32.mrb[0].mxu0
        %1070 = vmatprep.mubr.bf16.mxu0 0
        %1071 = vmatmul.mubr.bf16.gmra.mrb[0].mxu0 %v798
        %v1072 = vpop.f32.mrb[0].mxu0
        %v1073 = vadd.f32 0.0, %v1072
        %v1074 = vpop.f32.mrb[0].mxu0
        %v1075 = vpop.f32.mrb[0].mxu0
        %v1076 = vadd.f32 0.0, %v1075
        %v1077 = vpop.f32.mrb[0].mxu0
        %1078 = vmatprep.mubr.bf16.mxu0 0
        %1079 = vmatmul.mubr.bf16.gmra.mrb[0].mxu0 %v799
        %v1080 = vpop.f32.mrb[0].mxu0
        %v1081 = vadd.f32 0.0, %v1080
        %v1082 = vpop.f32.mrb[0].mxu0
        %v1083 = vpop.f32.mrb[0].mxu0
        %v1084 = vadd.f32 0.0, %v1083
        %v1085 = vpop.f32.mrb[0].mxu0
        %1086 = vmatprep.mubr.bf16.mxu0 0
        %1087 = vmatmul.mubr.bf16.gmra.mrb[0].mxu0 %v800
        %v1088 = vpop.f32.mrb[0].mxu0
        %v1089 = vadd.f32 0.0, %v1088
        %v1090 = vpop.f32.mrb[0].mxu0
        %v1091 = vpop.f32.mrb[0].mxu0
        %v1092 = vadd.f32 0.0, %v1091
        %v1093 = vpop.f32.mrb[0].mxu0
        %1094 = vmatprep.mubr.bf16.mxu0 0
        %1095 = vmatmul.mubr.bf16.gmra.mrb[0].mxu0 %v801
        %v1096 = vpop.f32.mrb[0].mxu0
        %v1097 = vadd.f32 0.0, %v1096
        %v1098 = vpop.f32.mrb[0].mxu0
        %v1099 = vpop.f32.mrb[0].mxu0
        %v1100 = vadd.f32 0.0, %v1099
        %v1101 = vpop.f32.mrb[0].mxu0
        %1102 = vmatprep.mubr.bf16.mxu0 0
        %1103 = vmatmul.mubr.bf16.gmra.mrb[0].mxu0 %v802
        %v1104 = vpop.f32.mrb[0].mxu0
        %v1105 = vadd.f32 0.0, %v1104
        %v1106 = vpop.f32.mrb[0].mxu0
        %v1107 = vpop.f32.mrb[0].mxu0
        %v1108 = vadd.f32 0.0, %v1107
        %v1109 = vpop.f32.mrb[0].mxu0
        %1110 = vmatprep.mubr.bf16.mxu0 0
        %1111 = vmatmul.mubr.bf16.gmra.mrb[0].mxu0 %v803
        %v1112 = vpop.f32.mrb[0].mxu0
        %v1113 = vadd.f32 0.0, %v1112
        %v1114 = vpop.f32.mrb[0].mxu0
        %v1115 = vpop.f32.mrb[0].mxu0
        %v1116 = vadd.f32 0.0, %v1115
        %v1117 = vpop.f32.mrb[0].mxu0
        %1118 = vmatprep.mubr.bf16.mxu0 0
        %1119 = vmatmul.mubr.bf16.gmra.mrb[0].mxu0 %v804
        %v1120 = vpop.f32.mrb[0].mxu0
        %v1121 = vadd.f32 0.0, %v1120
        %v1122 = vpop.f32.mrb[0].mxu0
        %v1123 = vpop.f32.mrb[0].mxu0
        %v1124 = vadd.f32 0.0, %v1123
        %v1125 = vpop.f32.mrb[0].mxu0
        %1126 = vdwg.mxu0
        %v1127 = vmax.f32 %v904, %v1065
        %v1128 = vmax.f32 %v907, %v1068
        %v1129 = vmax.f32 %v912, %v1073
        %v1130 = vmax.f32 %v915, %v1076
        %v1131 = vmax.f32 %v920, %v1081
        %v1132 = vmax.f32 %v923, %v1084
        %v1133 = vmax.f32 %v928, %v1089
        %v1134 = vmax.f32 %v931, %v1092
        %v1135 = vmax.f32 %v936, %v1097
        %v1136 = vmax.f32 %v939, %v1100
        %v1137 = vmax.f32 %v944, %v1105
        %v1138 = vmax.f32 %v947, %v1108
        %v1139 = vmax.f32 %v952, %v1113
        %v1140 = vmax.f32 %v955, %v1116
        %v1141 = vmax.f32 %v960, %v1121
        %v1142 = vmax.f32 %v963, %v1124
        %v1143 = vlaneseq
        %v1144 = vshrl.u32 %v1143, 7
        %v1145 = vsub.s32 1, %v1144
        %v1146 = vrot.slane %v760, %v1145
        %v1147 = vadd.f32 %v1127, %v1146
        %v1148 = vadd.f32 %v1128, %v1146
        %v1149 = vadd.f32 %v1129, %v1146
        %v1150 = vadd.f32 %v1130, %v1146
        %v1151 = vadd.f32 %v1131, %v1146
        %v1152 = vadd.f32 %v1132, %v1146
        %v1153 = vadd.f32 %v1133, %v1146
        %v1154 = vadd.f32 %v1134, %v1146
        %v1155 = vadd.f32 %v1135, %v1146
        %v1156 = vadd.f32 %v1136, %v1146
        %v1157 = vadd.f32 %v1137, %v1146
        %v1158 = vadd.f32 %v1138, %v1146
        %v1159 = vadd.f32 %v1139, %v1146
        %v1160 = vadd.f32 %v1140, %v1146
        %v1161 = vadd.f32 %v1141, %v1146
        %v1162 = vadd.f32 %v1142, %v1146
        %v1163 = vmax.f32 %v1147, 0.0
        %v1164 = vmax.f32 %v1148, 0.0
        %v1165 = vmax.f32 %v1149, 0.0
        %v1166 = vmax.f32 %v1150, 0.0
        %v1167 = vmax.f32 %v1151, 0.0
        %v1168 = vmax.f32 %v1152, 0.0
        %v1169 = vmax.f32 %v1153, 0.0
        %v1170 = vmax.f32 %v1154, 0.0
        %v1171 = vmax.f32 %v1155, 0.0
        %v1172 = vmax.f32 %v1156, 0.0
        %v1173 = vmax.f32 %v1157, 0.0
        %v1174 = vmax.f32 %v1158, 0.0
        %v1175 = vmax.f32 %v1159, 0.0
        %v1176 = vmax.f32 %v1160, 0.0
        %v1177 = vmax.f32 %v1161, 0.0
        %v1178 = vmax.f32 %v1162, 0.0
        %v1179 = vpack.c.bf16 %v1164, %v1163
        %v1180 = vpack.c.bf16 %v1166, %v1165
        %v1181 = vpack.c.bf16 %v1168, %v1167
        %v1182 = vpack.c.bf16 %v1170, %v1169
        %v1183 = vpack.c.bf16 %v1172, %v1171
        %v1184 = vpack.c.bf16 %v1174, %v1173
        %v1185 = vpack.c.bf16 %v1176, %v1175
        %v1186 = vpack.c.bf16 %v1178, %v1177
        %v1187 = vld [vmem:[#allocation2 + $0xe0] sm:$0xf]
        %v1188 = vld [vmem:[#allocation2 + $0xe4] sm:$0xf]
        %v1189 = vld [vmem:[#allocation2 + $0xe8] sm:$0xf]
        %v1190 = vld [vmem:[#allocation2 + $0xec] sm:$0xf]
        %v1191 = vld [vmem:[#allocation2 + $0xf0] sm:$0xf]
        %v1192 = vld [vmem:[#allocation2 + $0xf4] sm:$0xf]
        %v1193 = vld [vmem:[#allocation2 + $0xf8] sm:$0xf]
        %v1194 = vld [vmem:[#allocation2 + $0xfc] sm:$0xf]
        %v1195 = vld [vmem:[#allocation2 + $0x100] sm:$0xf]
        %v1196 = vld [vmem:[#allocation2 + $0x104] sm:$0xf]
        %v1197 = vld [vmem:[#allocation2 + $0x108] sm:$0xf]
        %v1198 = vld [vmem:[#allocation2 + $0x10c] sm:$0xf]
        %v1199 = vld [vmem:[#allocation2 + $0x110] sm:$0xf]
        %v1200 = vld [vmem:[#allocation2 + $0x114] sm:$0xf]
        %v1201 = vld [vmem:[#allocation2 + $0x118] sm:$0xf]
        %v1202 = vld [vmem:[#allocation2 + $0x11c] sm:$0xf]
        %v1203 = vld [vmem:[#allocation2 + $0x120] sm:$0x2]
        %v1204 = vunpack.c.l.bf16 %v1203
        %v1205 = vlaneseq
        %v1206 = vshrl.u32 %v1205, 7
        %v1207 = vsub.s32 2, %v1206
        %v1208 = vrot.slane %v1204, %v1207
        %v1225 = vunpack.c.l.b16 %v1187
        %v1226 = vunpack.c.l.b16 %v1188
        %v1227 = vunpack.c.l.b16 %v1189
        %v1228 = vunpack.c.l.b16 %v1190
        %v1229 = vunpack.c.l.b16 %v1191
        %v1230 = vunpack.c.l.b16 %v1192
        %v1231 = vunpack.c.l.b16 %v1193
        %v1232 = vunpack.c.l.b16 %v1194
        %v1233 = vunpack.c.l.b16 %v1195
        %v1234 = vunpack.c.l.b16 %v1196
        %v1235 = vunpack.c.l.b16 %v1197
        %v1236 = vunpack.c.l.b16 %v1198
        %v1237 = vunpack.c.l.b16 %v1199
        %v1238 = vunpack.c.l.b16 %v1200
        %v1239 = vunpack.c.l.b16 %v1201
        %v1240 = vunpack.c.l.b16 %v1202
        %v1241 = vpack.c.b16 %v1226, %v1225
        %v1242 = vpack.c.b16 %v1228, %v1227
        %v1243 = vpack.c.b16 %v1230, %v1229
        %v1244 = vpack.c.b16 %v1232, %v1231
        %v1245 = vpack.c.b16 %v1234, %v1233
        %v1246 = vpack.c.b16 %v1236, %v1235
        %v1247 = vpack.c.b16 %v1238, %v1237
        %v1248 = vpack.c.b16 %v1240, %v1239
        %1257 = vmatprep.subr.bf16.mxu0 0
        %1258 = vmatpush1.bf16.msra.mxu0 %v1241
        %1259 = vmatprep.subr.bf16.mxu0 0
        %1260 = vmatpush1.bf16.msra.mxu0 %v1242
        %1261 = vmatprep.subr.bf16.mxu0 0
        %1262 = vmatpush1.bf16.msra.mxu0 %v1243
        %1263 = vmatprep.subr.bf16.mxu0 0
        %1264 = vmatpush1.bf16.msra.mxu0 %v1244
        %1265 = vmatprep.subr.bf16.mxu0 0
        %1266 = vmatpush1.bf16.msra.mxu0 %v1245
        %1267 = vmatprep.subr.bf16.mxu0 0
        %1268 = vmatpush1.bf16.msra.mxu0 %v1246
        %1269 = vmatprep.subr.bf16.mxu0 0
        %1270 = vmatpush1.bf16.msra.mxu0 %v1247
        %1271 = vmatprep.subr.bf16.mxu0 0
        %1272 = vmatpush1.bf16.msra.mxu0 %v1248
        %1273 = vmatprep.subr.bf16.mxu0 0
        %1274 = vmatpush1.bf16.msra.mxu0 0
        %1275 = vmatprep.subr.bf16.mxu0 0
        %1276 = vmatpush1.bf16.msra.mxu0 0
        %1277 = vmatprep.subr.bf16.mxu0 0
        %1278 = vmatpush1.bf16.msra.mxu0 0
        %1279 = vmatprep.subr.bf16.mxu0 0
        %1280 = vmatpush1.bf16.msra.mxu0 0
        %1281 = vmatprep.subr.bf16.mxu0 0
        %1282 = vmatpush1.bf16.msra.mxu0 0
        %1283 = vmatprep.subr.bf16.mxu0 0
        %1284 = vmatpush1.bf16.msra.mxu0 0
        %1285 = vmatprep.subr.bf16.mxu0 0
        %1286 = vmatpush1.bf16.msra.mxu0 0
        %1287 = vmatprep.subr.bf16.mxu0 0
        %1288 = vmatpush1.bf16.msra.mxu0 0
        %1289 = vmatprep.mubr.bf16.mxu0 0
        %1290 = vmatmul.mubr.bf16.gmra.mrb[0].mxu0 %v1179
        %v1291 = vpop.f32.mrb[0].mxu0
        %v1292 = vadd.f32 %v1208, %v1291
        %v1293 = vpop.f32.mrb[0].mxu0
        %v1294 = vpop.f32.mrb[0].mxu0
        %v1295 = vadd.f32 %v1208, %v1294
        %v1296 = vpop.f32.mrb[0].mxu0
        %1297 = vmatprep.mubr.bf16.mxu0 0
        %1298 = vmatmul.mubr.bf16.gmra.mrb[0].mxu0 %v1180
        %v1299 = vpop.f32.mrb[0].mxu0
        %v1300 = vadd.f32 %v1208, %v1299
        %v1301 = vpop.f32.mrb[0].mxu0
        %v1302 = vpop.f32.mrb[0].mxu0
        %v1303 = vadd.f32 %v1208, %v1302
        %v1304 = vpop.f32.mrb[0].mxu0
        %1305 = vmatprep.mubr.bf16.mxu0 0
        %1306 = vmatmul.mubr.bf16.gmra.mrb[0].mxu0 %v1181
        %v1307 = vpop.f32.mrb[0].mxu0
        %v1308 = vadd.f32 %v1208, %v1307
        %v1309 = vpop.f32.mrb[0].mxu0
        %v1310 = vpop.f32.mrb[0].mxu0
        %v1311 = vadd.f32 %v1208, %v1310
        %v1312 = vpop.f32.mrb[0].mxu0
        %1313 = vmatprep.mubr.bf16.mxu0 0
        %1314 = vmatmul.mubr.bf16.gmra.mrb[0].mxu0 %v1182
        %v1315 = vpop.f32.mrb[0].mxu0
        %v1316 = vadd.f32 %v1208, %v1315
        %v1317 = vpop.f32.mrb[0].mxu0
        %v1318 = vpop.f32.mrb[0].mxu0
        %v1319 = vadd.f32 %v1208, %v1318
        %v1320 = vpop.f32.mrb[0].mxu0
        %1321 = vmatprep.mubr.bf16.mxu0 0
        %1322 = vmatmul.mubr.bf16.gmra.mrb[0].mxu0 %v1183
        %v1323 = vpop.f32.mrb[0].mxu0
        %v1324 = vadd.f32 %v1208, %v1323
        %v1325 = vpop.f32.mrb[0].mxu0
        %v1326 = vpop.f32.mrb[0].mxu0
        %v1327 = vadd.f32 %v1208, %v1326
        %v1328 = vpop.f32.mrb[0].mxu0
        %1329 = vmatprep.mubr.bf16.mxu0 0
        %1330 = vmatmul.mubr.bf16.gmra.mrb[0].mxu0 %v1184
        %v1331 = vpop.f32.mrb[0].mxu0
        %v1332 = vadd.f32 %v1208, %v1331
        %v1333 = vpop.f32.mrb[0].mxu0
        %v1334 = vpop.f32.mrb[0].mxu0
        %v1335 = vadd.f32 %v1208, %v1334
        %v1336 = vpop.f32.mrb[0].mxu0
        %1337 = vmatprep.mubr.bf16.mxu0 0
        %1338 = vmatmul.mubr.bf16.gmra.mrb[0].mxu0 %v1185
        %v1339 = vpop.f32.mrb[0].mxu0
        %v1340 = vadd.f32 %v1208, %v1339
        %v1341 = vpop.f32.mrb[0].mxu0
        %v1342 = vpop.f32.mrb[0].mxu0
        %v1343 = vadd.f32 %v1208, %v1342
        %v1344 = vpop.f32.mrb[0].mxu0
        %1345 = vmatprep.mubr.bf16.mxu0 0
        %1346 = vmatmul.mubr.bf16.gmra.mrb[0].mxu0 %v1186
        %v1347 = vpop.f32.mrb[0].mxu0
        %v1348 = vadd.f32 %v1208, %v1347
        %v1349 = vpop.f32.mrb[0].mxu0
        %v1350 = vpop.f32.mrb[0].mxu0
        %v1351 = vadd.f32 %v1208, %v1350
        %v1352 = vpop.f32.mrb[0].mxu0
        %1353 = vdwg.mxu0
        %v1354 = vmax.f32 %v1292, 0.0
        %v1355 = vmax.f32 %v1295, 0.0
        %v1356 = vmax.f32 %v1300, 0.0
        %v1357 = vmax.f32 %v1303, 0.0
        %v1358 = vmax.f32 %v1308, 0.0
        %v1359 = vmax.f32 %v1311, 0.0
        %v1360 = vmax.f32 %v1316, 0.0
        %v1361 = vmax.f32 %v1319, 0.0
        %v1362 = vmax.f32 %v1324, 0.0
        %v1363 = vmax.f32 %v1327, 0.0
        %v1364 = vmax.f32 %v1332, 0.0
        %v1365 = vmax.f32 %v1335, 0.0
        %v1366 = vmax.f32 %v1340, 0.0
        %v1367 = vmax.f32 %v1343, 0.0
        %v1368 = vmax.f32 %v1348, 0.0
        %v1369 = vmax.f32 %v1351, 0.0
        %v1370 = vlaneseq
        %v1371 = vshrl.u32 %v1370, 7
        %v1372 = vsub.s32 3, %v1371
        %v1373 = vrot.slane %v1204, %v1372
        %v1374 = vmul.f32 %v1354, %v1373
        %v1375 = vmul.f32 %v1355, %v1373
        %v1376 = vmul.f32 %v1356, %v1373
        %v1377 = vmul.f32 %v1357, %v1373
        %v1378 = vmul.f32 %v1358, %v1373
        %v1379 = vmul.f32 %v1359, %v1373
        %v1380 = vmul.f32 %v1360, %v1373
        %v1381 = vmul.f32 %v1361, %v1373
        %v1382 = vmul.f32 %v1362, %v1373
        %v1383 = vmul.f32 %v1363, %v1373
        %v1384 = vmul.f32 %v1364, %v1373
        %v1385 = vmul.f32 %v1365, %v1373
        %v1386 = vmul.f32 %v1366, %v1373
        %v1387 = vmul.f32 %v1367, %v1373
        %v1388 = vmul.f32 %v1368, %v1373
        %v1389 = vmul.f32 %v1369, %v1373
        %1390 = vadd.xlane.f32.xlu0 %v1374
        %v1391 = vpop.xlane.xlu0 %1390
        %1392 = vadd.xlane.f32.xlu0 %v1375
        %v1393 = vpop.xlane.xlu0 %1392
        %1394 = vadd.xlane.f32.xlu0 %v1376
        %v1395 = vpop.xlane.xlu0 %1394
        %1396 = vadd.xlane.f32.xlu0 %v1377
        %v1397 = vpop.xlane.xlu0 %1396
        %1398 = vadd.xlane.f32.xlu0 %v1378
        %v1399 = vpop.xlane.xlu0 %1398
        %1400 = vadd.xlane.f32.xlu0 %v1379
        %v1401 = vpop.xlane.xlu0 %1400
        %1402 = vadd.xlane.f32.xlu0 %v1380
        %v1403 = vpop.xlane.xlu0 %1402
        %1404 = vadd.xlane.f32.xlu0 %v1381
        %v1405 = vpop.xlane.xlu0 %1404
        %1406 = vadd.xlane.f32.xlu0 %v1382
        %v1407 = vpop.xlane.xlu0 %1406
        %1408 = vadd.xlane.f32.xlu0 %v1383
        %v1409 = vpop.xlane.xlu0 %1408
        %1410 = vadd.xlane.f32.xlu0 %v1384
        %v1411 = vpop.xlane.xlu0 %1410
        %1412 = vadd.xlane.f32.xlu0 %v1385
        %v1413 = vpop.xlane.xlu0 %1412
        %1414 = vadd.xlane.f32.xlu0 %v1386
        %v1415 = vpop.xlane.xlu0 %1414
        %1416 = vadd.xlane.f32.xlu0 %v1387
        %v1417 = vpop.xlane.xlu0 %1416
        %1418 = vadd.xlane.f32.xlu0 %v1388
        %v1419 = vpop.xlane.xlu0 %1418
        %1420 = vadd.xlane.f32.xlu0 %v1389
        %v1421 = vpop.xlane.xlu0 %1420
        %v1422 = vld [vmem:[#allocation2 + $0x120] sm:$0x4]
        %v1423 = vunpack.c.l.bf16 %v1422
        %v1424 = vlaneseq
        %v1425 = vshrl.u32 %v1424, 7
        %v1426 = vsub.s32 4, %v1425
        %v1427 = vrot.slane %v1423, %v1426
        %v1428 = vadd.f32 %v1391, %v1427
        %v1429 = vadd.f32 %v1393, %v1427
        %v1430 = vadd.f32 %v1395, %v1427
        %v1431 = vadd.f32 %v1397, %v1427
        %v1432 = vadd.f32 %v1399, %v1427
        %v1433 = vadd.f32 %v1401, %v1427
        %v1434 = vadd.f32 %v1403, %v1427
        %v1435 = vadd.f32 %v1405, %v1427
        %v1436 = vadd.f32 %v1407, %v1427
        %v1437 = vadd.f32 %v1409, %v1427
        %v1438 = vadd.f32 %v1411, %v1427
        %v1439 = vadd.f32 %v1413, %v1427
        %v1440 = vadd.f32 %v1415, %v1427
        %v1441 = vadd.f32 %v1417, %v1427
        %v1442 = vadd.f32 %v1419, %v1427
        %v1443 = vadd.f32 %v1421, %v1427
        %vm1444 = vcmask 7168
        %1445 = vst.msk [vmem:[%s160] sm:$0xff] %vm1444, %v1428
        %1446 = vst.msk [vmem:[%s160 + $0x8] sm:$0xff] %vm1444, %v1429
        %1447 = vst.msk [vmem:[%s160 + $0x10] sm:$0xff] %vm1444, %v1430
        %1448 = vst.msk [vmem:[%s160 + $0x18] sm:$0xff] %vm1444, %v1431
        %1449 = vst.msk [vmem:[%s160 + $0x20] sm:$0xff] %vm1444, %v1432
        %1450 = vst.msk [vmem:[%s160 + $0x28] sm:$0xff] %vm1444, %v1433
        %1451 = vst.msk [vmem:[%s160 + $0x30] sm:$0xff] %vm1444, %v1434
        %1452 = vst.msk [vmem:[%s160 + $0x38] sm:$0xff] %vm1444, %v1435
        %1453 = vst.msk [vmem:[%s160 + $0x40] sm:$0xff] %vm1444, %v1436
        %1454 = vst.msk [vmem:[%s160 + $0x48] sm:$0xff] %vm1444, %v1437
        %1455 = vst.msk [vmem:[%s160 + $0x50] sm:$0xff] %vm1444, %v1438
        %1456 = vst.msk [vmem:[%s160 + $0x58] sm:$0xff] %vm1444, %v1439
        %1457 = vst.msk [vmem:[%s160 + $0x60] sm:$0xff] %vm1444, %v1440
        %1458 = vst.msk [vmem:[%s160 + $0x68] sm:$0xff] %vm1444, %v1441
        %1459 = vst.msk [vmem:[%s160 + $0x70] sm:$0xff] %vm1444, %v1442
        %1460 = vst.msk [vmem:[%s160 + $0x78] sm:$0xff] %vm1444, %v1443
        %s1461 = sand.u32 %s69, 1
        %s1462 = sand.u32 %s69, 1
        %s1463 = smul.addr %s1462, 128
        %s1464 = scalar_lea.vmem [#allocation4], %s1463
        // Predicated region
        $region33: #{_convnn_batched.1} parent=27 // pred_check
          %p1465 = pneg %p79
        $region34: #{_convnn_batched.1} parent=27 // pred_check_branch
          %1467 = sbr.rel (%p1465) target = $region36
        $region35: #{_convnn_batched.1} parent=27 // pred_region
          %s1468 = smul.u32 16, %s14
          %s1469 = ssub.s32 25, %s1468
          %p1470 = scmp.lt.s32.totalorder %s1469, 16
          %s1471 = scalar_select %p1470, %s1469, 16
          %s1472 = smul.u32 128, %s1471
          %p1473 = scmp.ne.s32.totalorder 0, %s1472
          %s1474 = smul.addr %s1468, 8
          %s1475 = scalar_lea.vmem %s2, %s1474
          // Predicated region
          $region37: #{_convnn_batched.1} parent=35 // pred_check
            %p1476 = pneg %p1473
          $region38: #{_convnn_batched.1} parent=35 // pred_check_branch
            %1478 = sbr.rel (%p1476) target = $region40
          $region39: #{_convnn_batched.1} parent=35 // pred_region
            // Predicated region
            $region41: #{_convnn_batched.1} parent=39 // pred_check
              _
            $region42: #{_convnn_batched.1} parent=39 // pred_check_branch
              %1480 = sbr.rel (0) target = $region44
            $region43: #{_convnn_batched.1} parent=39 // pred_region
              // Predicated region
              $region63: #{_convnn_batched.1} parent=43 // pred_check
                _
              $region64: #{_convnn_batched.1} parent=43 // pred_check_branch
                %1559 = sbr.rel (0) target = $region66
              $region65: #{_convnn_batched.1} parent=43 // pred_region
                %s1560 = sshrl.u32 %s1471, 4
                // While loop
                $region67: #{_convnn_batched.1} parent=65 // loop_pre_header
                  _
                $region68: #{_convnn_batched.1} parent=65 // loop_header
                  %s1562 = sphi 0, %s1564
                  %p1563 = scmp.ge.s32.totalorder %s1562, %s1560
                  %s1567 = sphi 0, %s1604
                  %s1568 = sphi %s1464, %s1607
                  %s1569 = sphi %s1475, %s1608
                $region69: #{_convnn_batched.1} parent=65 // loop_header_branch
                  %1566 = sbr.rel (%p1563) target = $region73
                $region70: #{_convnn_batched.1} parent=65 // loop_body
                  %v1570 = vld [vmem:[%s1568] sm:$0xff]
                  %1571 = vst [vmem:[%s1569] sm:$0xff] %v1570
                  %v1572 = vld [vmem:[%s1568 + $0x8] sm:$0xff]
                  %1573 = vst [vmem:[%s1569 + $0x8] sm:$0xff] %v1572
                  %v1574 = vld [vmem:[%s1568 + $0x10] sm:$0xff]
                  %1575 = vst [vmem:[%s1569 + $0x10] sm:$0xff] %v1574
                  %v1576 = vld [vmem:[%s1568 + $0x18] sm:$0xff]
                  %1577 = vst [vmem:[%s1569 + $0x18] sm:$0xff] %v1576
                  %v1578 = vld [vmem:[%s1568 + $0x20] sm:$0xff]
                  %1579 = vst [vmem:[%s1569 + $0x20] sm:$0xff] %v1578
                  %v1580 = vld [vmem:[%s1568 + $0x28] sm:$0xff]
                  %1581 = vst [vmem:[%s1569 + $0x28] sm:$0xff] %v1580
                  %v1582 = vld [vmem:[%s1568 + $0x30] sm:$0xff]
                  %1583 = vst [vmem:[%s1569 + $0x30] sm:$0xff] %v1582
                  %v1584 = vld [vmem:[%s1568 + $0x38] sm:$0xff]
                  %1585 = vst [vmem:[%s1569 + $0x38] sm:$0xff] %v1584
                  %v1586 = vld [vmem:[%s1568 + $0x40] sm:$0xff]
                  %1587 = vst [vmem:[%s1569 + $0x40] sm:$0xff] %v1586
                  %v1588 = vld [vmem:[%s1568 + $0x48] sm:$0xff]
                  %1589 = vst [vmem:[%s1569 + $0x48] sm:$0xff] %v1588
                  %v1590 = vld [vmem:[%s1568 + $0x50] sm:$0xff]
                  %1591 = vst [vmem:[%s1569 + $0x50] sm:$0xff] %v1590
                  %v1592 = vld [vmem:[%s1568 + $0x58] sm:$0xff]
                  %1593 = vst [vmem:[%s1569 + $0x58] sm:$0xff] %v1592
                  %v1594 = vld [vmem:[%s1568 + $0x60] sm:$0xff]
                  %1595 = vst [vmem:[%s1569 + $0x60] sm:$0xff] %v1594
                  %v1596 = vld [vmem:[%s1568 + $0x68] sm:$0xff]
                  %1597 = vst [vmem:[%s1569 + $0x68] sm:$0xff] %v1596
                  %v1598 = vld [vmem:[%s1568 + $0x70] sm:$0xff]
                  %1599 = vst [vmem:[%s1569 + $0x70] sm:$0xff] %v1598
                  %v1600 = vld [vmem:[%s1568 + $0x78] sm:$0xff]
                  %1601 = vst [vmem:[%s1569 + $0x78] sm:$0xff] %v1600
                  %s1602 = sadd.s32 1, %s1567
                  %p1603 = scmp.ge.s32.totalorder %s1602, %s1560
                  %s1604 = scalar_select %p1603, 0, %s1602
                  %s1605 = smul.u32 %s1604, 128
                  %s1606 = smul.u32 %s1604, 128
                  %s1607 = scalar_lea.vmem %s1464, %s1605 [#allocation4]
                  %s1608 = scalar_lea.vmem %s1475, %s1606
                $region71: #{_convnn_batched.1} parent=65 // loop_footer
                  %s1564 = sadd.s32 %s1562, 1
                $region72: #{_convnn_batched.1} parent=65 // loop_footer_branch
                  %1561 = sbr.rel target = $region68
                $region73: #{_convnn_batched.1} parent=65 // loop_exit
                  _
                %s1609 = sshrl.u32 %s1471, 4
                %s1610 = sand.u32 %s1471, 15
                %s1611 = smul.u32 %s1609, 16
                %s1612 = smul.u32 8, %s1611
                %s1613 = scalar_lea.vmem %s1464, %s1612 [#allocation4]
                %s1614 = smul.u32 8, %s1611
                %s1615 = scalar_lea.vmem %s1475, %s1614
                // While loop
                $region74: #{_convnn_batched.1} parent=65 // loop_pre_header
                  _
                $region75: #{_convnn_batched.1} parent=65 // loop_header
                  %s1617 = sphi 0, %s1619
                  %p1618 = scmp.ge.s32.totalorder %s1617, %s1610
                  %s1622 = sphi 0, %s1629
                  %s1623 = sphi %s1613, %s1632
                  %s1624 = sphi %s1615, %s1633
                $region76: #{_convnn_batched.1} parent=65 // loop_header_branch
                  %1621 = sbr.rel (%p1618) target = $region80
                $region77: #{_convnn_batched.1} parent=65 // loop_body
                  %v1625 = vld [vmem:[%s1623] sm:$0xff]
                  %1626 = vst [vmem:[%s1624] sm:$0xff] %v1625
                  %s1627 = sadd.s32 1, %s1622
                  %p1628 = scmp.ge.s32.totalorder %s1627, %s1610
                  %s1629 = scalar_select %p1628, 0, %s1627
                  %s1630 = smul.u32 %s1629, 8
                  %s1631 = smul.u32 %s1629, 8
                  %s1632 = scalar_lea.vmem %s1613, %s1630 [#allocation4]
                  %s1633 = scalar_lea.vmem %s1615, %s1631
                $region78: #{_convnn_batched.1} parent=65 // loop_footer
                  %s1619 = sadd.s32 %s1617, 1
                $region79: #{_convnn_batched.1} parent=65 // loop_footer_branch
                  %1616 = sbr.rel target = $region75
                $region80: #{_convnn_batched.1} parent=65 // loop_exit
                  _
              $region66: #{_convnn_batched.1} parent=43 // pred_fallthru
                _
              // Predicated region
              $region81: #{_convnn_batched.1} parent=43 // pred_check
                _
              $region82: #{_convnn_batched.1} parent=43 // pred_check_branch
                %1635 = sbr.rel target = $region84
              $region83: #{_convnn_batched.1} parent=43 // pred_region
                _
              $region84: #{_convnn_batched.1} parent=43 // pred_fallthru
                _
            $region44: #{_convnn_batched.1} parent=39 // pred_fallthru
              _
            // Predicated region
            $region45: #{_convnn_batched.1} parent=39 // pred_check
              _
            $region46: #{_convnn_batched.1} parent=39 // pred_check_branch
              %1482 = sbr.rel target = $region48
            $region47: #{_convnn_batched.1} parent=39 // pred_region
              %s1484 = sshrl.u32 %s1471, 4
              // While loop
              $region49: #{_convnn_batched.1} parent=47 // loop_pre_header
                _
              $region50: #{_convnn_batched.1} parent=47 // loop_header
                %s1486 = sphi 0, %s1488
                %p1487 = scmp.ge.s32.totalorder %s1486, %s1484
                %s1491 = sphi 0, %s1528
                %s1492 = sphi %s1464, %s1531
                %s1493 = sphi %s1475, %s1532
              $region51: #{_convnn_batched.1} parent=47 // loop_header_branch
                %1490 = sbr.rel (%p1487) target = $region55
              $region52: #{_convnn_batched.1} parent=47 // loop_body
                %v1494 = vld [vmem:[%s1492] sm:$0xff]
                %1495 = vst [vmem:[%s1493] sm:$0xff] %v1494
                %v1496 = vld [vmem:[%s1492 + $0x8] sm:$0xff]
                %1497 = vst [vmem:[%s1493 + $0x8] sm:$0xff] %v1496
                %v1498 = vld [vmem:[%s1492 + $0x10] sm:$0xff]
                %1499 = vst [vmem:[%s1493 + $0x10] sm:$0xff] %v1498
                %v1500 = vld [vmem:[%s1492 + $0x18] sm:$0xff]
                %1501 = vst [vmem:[%s1493 + $0x18] sm:$0xff] %v1500
                %v1502 = vld [vmem:[%s1492 + $0x20] sm:$0xff]
                %1503 = vst [vmem:[%s1493 + $0x20] sm:$0xff] %v1502
                %v1504 = vld [vmem:[%s1492 + $0x28] sm:$0xff]
                %1505 = vst [vmem:[%s1493 + $0x28] sm:$0xff] %v1504
                %v1506 = vld [vmem:[%s1492 + $0x30] sm:$0xff]
                %1507 = vst [vmem:[%s1493 + $0x30] sm:$0xff] %v1506
                %v1508 = vld [vmem:[%s1492 + $0x38] sm:$0xff]
                %1509 = vst [vmem:[%s1493 + $0x38] sm:$0xff] %v1508
                %v1510 = vld [vmem:[%s1492 + $0x40] sm:$0xff]
                %1511 = vst [vmem:[%s1493 + $0x40] sm:$0xff] %v1510
                %v1512 = vld [vmem:[%s1492 + $0x48] sm:$0xff]
                %1513 = vst [vmem:[%s1493 + $0x48] sm:$0xff] %v1512
                %v1514 = vld [vmem:[%s1492 + $0x50] sm:$0xff]
                %1515 = vst [vmem:[%s1493 + $0x50] sm:$0xff] %v1514
                %v1516 = vld [vmem:[%s1492 + $0x58] sm:$0xff]
                %1517 = vst [vmem:[%s1493 + $0x58] sm:$0xff] %v1516
                %v1518 = vld [vmem:[%s1492 + $0x60] sm:$0xff]
                %1519 = vst [vmem:[%s1493 + $0x60] sm:$0xff] %v1518
                %v1520 = vld [vmem:[%s1492 + $0x68] sm:$0xff]
                %1521 = vst [vmem:[%s1493 + $0x68] sm:$0xff] %v1520
                %v1522 = vld [vmem:[%s1492 + $0x70] sm:$0xff]
                %1523 = vst [vmem:[%s1493 + $0x70] sm:$0xff] %v1522
                %v1524 = vld [vmem:[%s1492 + $0x78] sm:$0xff]
                %1525 = vst [vmem:[%s1493 + $0x78] sm:$0xff] %v1524
                %s1526 = sadd.s32 1, %s1491
                %p1527 = scmp.ge.s32.totalorder %s1526, %s1484
                %s1528 = scalar_select %p1527, 0, %s1526
                %s1529 = smul.u32 %s1528, 128
                %s1530 = smul.u32 %s1528, 128
                %s1531 = scalar_lea.vmem %s1464, %s1529 [#allocation4]
                %s1532 = scalar_lea.vmem %s1475, %s1530
              $region53: #{_convnn_batched.1} parent=47 // loop_footer
                %s1488 = sadd.s32 %s1486, 1
              $region54: #{_convnn_batched.1} parent=47 // loop_footer_branch
                %1485 = sbr.rel target = $region50
              $region55: #{_convnn_batched.1} parent=47 // loop_exit
                _
              %s1533 = sshrl.u32 %s1471, 4
              %s1534 = sand.u32 %s1471, 15
              %s1535 = smul.u32 %s1533, 16
              %s1536 = smul.u32 8, %s1535
              %s1537 = scalar_lea.vmem %s1464, %s1536 [#allocation4]
              %s1538 = smul.u32 8, %s1535
              %s1539 = scalar_lea.vmem %s1475, %s1538
              // While loop
              $region56: #{_convnn_batched.1} parent=47 // loop_pre_header
                _
              $region57: #{_convnn_batched.1} parent=47 // loop_header
                %s1541 = sphi 0, %s1543
                %p1542 = scmp.ge.s32.totalorder %s1541, %s1534
                %s1546 = sphi 0, %s1553
                %s1547 = sphi %s1537, %s1556
                %s1548 = sphi %s1539, %s1557
              $region58: #{_convnn_batched.1} parent=47 // loop_header_branch
                %1545 = sbr.rel (%p1542) target = $region62
              $region59: #{_convnn_batched.1} parent=47 // loop_body
                %v1549 = vld [vmem:[%s1547] sm:$0xff]
                %1550 = vst [vmem:[%s1548] sm:$0xff] %v1549
                %s1551 = sadd.s32 1, %s1546
                %p1552 = scmp.ge.s32.totalorder %s1551, %s1534
                %s1553 = scalar_select %p1552, 0, %s1551
                %s1554 = smul.u32 %s1553, 8
                %s1555 = smul.u32 %s1553, 8
                %s1556 = scalar_lea.vmem %s1537, %s1554 [#allocation4]
                %s1557 = scalar_lea.vmem %s1539, %s1555
              $region60: #{_convnn_batched.1} parent=47 // loop_footer
                %s1543 = sadd.s32 %s1541, 1
              $region61: #{_convnn_batched.1} parent=47 // loop_footer_branch
                %1540 = sbr.rel target = $region57
              $region62: #{_convnn_batched.1} parent=47 // loop_exit
                _
            $region48: #{_convnn_batched.1} parent=39 // pred_fallthru
              _
          $region40: #{_convnn_batched.1} parent=35 // pred_fallthru
            _
          %1636 = vnop
        $region36: #{_convnn_batched.1} parent=27 // pred_fallthru
          _
      $region28: #{_convnn_batched.1} parent=5 // pred_fallthru
        _
      %p1637 = scmp.le.s32.totalorder 2, %s9
      // Predicated region
      $region85: #{_convnn_batched.1} parent=5 // pred_check
        %p1638 = pneg %p1637
      $region86: #{_convnn_batched.1} parent=5 // pred_check_branch
        %1640 = sbr.rel (%p1638) target = $region88
      $region87: #{_convnn_batched.1} parent=5 // pred_region
        %s1641 = ssub.s32 %s9, 2
        // Predicated region
        $region89: #{_convnn_batched.1} parent=87 // pred_check
          %p1642 = pneg %p85
        $region90: #{_convnn_batched.1} parent=87 // pred_check_branch
          %1644 = sbr.rel (%p1642) target = $region92
        $region91: #{_convnn_batched.1} parent=87 // pred_region
          %s1645 = sand.u32 %s70, 1
          %s1646 = sand.u32 %s70, 1
          %s1647 = smul.addr %s1646, 128
          %s1648 = scalar_lea.vmem [#allocation4], %s1647
        $region92: #{_convnn_batched.1} parent=87 // pred_fallthru
          _
      $region88: #{_convnn_batched.1} parent=5 // pred_fallthru
        _
    $region6: #{_convnn_batched.1} parent=1 // loop_footer
      %s13 = sadd.s32 1, %s9
    $region7: #{_convnn_batched.1} parent=1 // loop_footer_branch
      %8 = sbr.rel target = $region3
    $region8: #{_convnn_batched.1} parent=1 // loop_exit
      _
    %1649 = vsyncpa [#allocation3], 1
    %s1650 = scalar_lea.sflag [#allocation3], 1
    %1651 = vsyncpa %s1650, 1

</llo_original>
